<compile_context>
chip_gen: v7x
topology: tpu7x:2x2x1
jax: 0.10.0
libtpu: 0.0.40
codegen_flags: <defaults>
</compile_context>

<pallas_src>
import functools

import jax
import jax.numpy as jnp
from jax.experimental import pallas as pl
from jax.experimental.pallas import tpu as pltpu


def _round_up(n, m):
    return ((n + m - 1) // m) * m


def _pick_batch_tile(B, elem_bytes, vmem_block_budget=4 * 1024 * 1024,
                     min_block_bytes=512 * 1024):
    """Batch-tile size: stay within the per-block VMEM budget, prefer >= 4
    grid steps (>= 2 per TensorCore on v7x with a parallel batch axis) so
    double-buffering has something to overlap, but never shrink blocks below
    ~512 KiB where per-step overhead dominates."""
    cap = max(1, vmem_block_budget // max(elem_bytes, 1))
    Bt = min(cap, B)
    if B >= 4:
        by_steps = max(B // 4, 1)
        by_size = max(min_block_bytes // max(elem_bytes, 1), 1)
        Bt = min(Bt, max(by_steps, by_size))
        Bt = min(Bt, B)
    return max(Bt, 1)


def _spatial_attention_kernel(Bt, C, H, W, ML, w_ref, b_ref, mask_ref, x_ref,
                              o_ref, pad_ref):
    # w_ref   : (98,) SMEM   -- Conv2d(2,1,7,7) weight flattened [c][kh][kw]
    # b_ref   : (1,)  SMEM   -- conv bias
    # mask_ref: (7, HW) VMEM -- per-kw column-validity masks (row 3 unused)
    # x_ref   : (Bt, C, HW) VMEM -- lane-dense input block (native dtype)
    # o_ref   : (Bt, C, HW) VMEM -- lane-dense output block (native dtype)
    # pad_ref : (2, Bt, ML + HW + ML) VMEM -- flat pooled maps w/ zero margins
    HW = H * W
    PADLEN = pad_ref.shape[-1]

    # --- Channel pooling (sublane reduction), fully lane-dense. ------------
    # This f32 view of x dies right after pooling; the epilogue re-reads
    # x_ref so no large value stays live across the 98-tap conv.
    x32 = x_ref[...].astype(jnp.float32)            # (Bt, C, HW)
    max_pool = jnp.max(x32, axis=1)                 # (Bt, HW)
    avg_pool = jnp.mean(x32, axis=1)                # (Bt, HW)

    # Zero only the margins (interior is fully overwritten every step).
    # Per-step zeroing is required for correctness with a "parallel" batch
    # axis: each TensorCore owns its own copy of the scratch.
    pad_ref[:, :, 0:ML] = jnp.zeros((2, Bt, ML), jnp.float32)
    pad_ref[:, :, ML + HW:PADLEN] = jnp.zeros(
        (2, Bt, PADLEN - ML - HW), jnp.float32)
    pad_ref[0, :, ML:ML + HW] = max_pool            # lane-aligned stores
    pad_ref[1, :, ML:ML + HW] = avg_pool

    # --- Direct (unrolled) 7x7 conv, 2 in-channels -> 1 out-channel, on the
    # flat layout.  Each tap is a static lane-offset window of the padded
    # map; vertical out-of-range taps land in the zeroed margins, horizontal
    # out-of-range taps are removed by the per-kw column mask applied ONCE
    # per kw.  Stays on the VPU (no MXU / im2col). --------------------------
    bias = b_ref[0]
    partials = []
    for kw in range(7):
        p0 = None   # channel-0 (max-pool) chain
        p1 = None   # channel-1 (avg-pool) chain
        for kh in range(7):
            start = ML + (kh - 3) * W + (kw - 3)
            w0 = w_ref[0 * 49 + kh * 7 + kw]
            w1 = w_ref[1 * 49 + kh * 7 + kw]
            t0 = w0 * pad_ref[0, :, start:start + HW]     # (Bt, HW)
            t1 = w1 * pad_ref[1, :, start:start + HW]
            p0 = t0 if p0 is None else p0 + t0
            p1 = t1 if p1 is None else p1 + t1
        part = p0 + p1
        if kw != 3:
            part = mask_ref[kw][None, :] * part           # one mask mul per kw
        partials.append(part)
    # Balanced-tree combine of the 7 independent per-kw partials.
    while len(partials) > 1:
        nxt = []
        for i in range(0, len(partials) - 1, 2):
            nxt.append(partials[i] + partials[i + 1])
        if len(partials) % 2 == 1:
            nxt.append(partials[-1])
        partials = nxt
    conv = partials[0] + bias                             # (Bt, HW)

    ms = jax.nn.sigmoid(conv)                             # (Bt, HW), f32
    gate = ms + 1.0                                       # (Ms + 1)*x == Ms*x + x
    o_ref[...] = (x_ref[...].astype(jnp.float32) *
                  gate[:, None, :]).astype(o_ref.dtype)


def spatial_attention(x, w, b):
    """x: (B, C, H, W); w: (1, 2, 7, 7); b: (1,).  Output dtype == x.dtype."""
    B, C, H, W = x.shape
    HW = H * W
    dtype = x.dtype
    itemsize = jnp.dtype(dtype).itemsize

    # Lane-dense layout (last dim = H*W) for all DMAs / stores / gating math.
    x_flat = x.reshape(B, C, HW)                    # native dtype passthrough
    w_flat = w.reshape(-1).astype(jnp.float32)      # (98,)
    b_flat = b.reshape(-1).astype(jnp.float32)      # (1,)

    elem_bytes = C * HW * itemsize
    Bt = _pick_batch_tile(B, elem_bytes)
    steps = pl.cdiv(B, Bt)
    B_pad = steps * Bt
    if B_pad != B:
        # Pad awkward batch sizes instead of collapsing the tile to 1.
        x_flat = jnp.pad(x_flat, ((0, B_pad - B), (0, 0), (0, 0)))

    # Flat padded pooled map: lane-aligned left margin (>= 3*W + 3) so the
    # interior store is aligned; right margin sized the same.
    ML = _round_up(3 * W + 3, 128)
    PADLEN = ML + HW + ML

    # Host-precomputed per-kw column-validity masks (row kw==3 is all-ones
    # and unused): tap kw reads source column c + kw - 3.
    col = jnp.arange(HW, dtype=jnp.int32) % W
    mask = jnp.stack(
        [((col >= (3 - kw)) & (col < (W + 3 - kw))).astype(jnp.float32)
         for kw in range(7)], axis=0)               # (7, HW)

    kernel = functools.partial(_spatial_attention_kernel, Bt, C, H, W, ML)

    cost = pl.CostEstimate(
        flops=2 * B_pad * C * HW            # pooling (max + mean)
              + 2 * 98 * B_pad * HW         # 7x7x2 conv taps
              + 2 * B_pad * C * HW,         # gated output
        transcendentals=B_pad * HW,         # sigmoid
        bytes_accessed=2 * B_pad * C * HW * itemsize,
    )

    out_flat = pl.pallas_call(
        kernel,
        out_shape=jax.ShapeDtypeStruct((B_pad, C, HW), dtype),
        grid_spec=pltpu.PrefetchScalarGridSpec(
            num_scalar_prefetch=0,
            grid=(steps,),
            in_specs=[
                pl.BlockSpec(memory_space=pltpu.MemorySpace.SMEM),   # weight
                pl.BlockSpec(memory_space=pltpu.MemorySpace.SMEM),   # bias
                pl.BlockSpec((7, HW), lambda i: (0, 0)),             # colmask
                pl.BlockSpec((Bt, C, HW), lambda i: (i, 0, 0)),      # x block
            ],
            out_specs=pl.BlockSpec((Bt, C, HW), lambda i: (i, 0, 0)),
            scratch_shapes=[pltpu.VMEM((2, Bt, PADLEN), jnp.float32)],
        ),
        compiler_params=pltpu.CompilerParams(
            dimension_semantics=("parallel",),      # batch steps independent
            vmem_limit_bytes=48 * 1024 * 1024,
        ),
        cost_estimate=cost,
    )(w_flat, b_flat, mask, x_flat)

    return out_flat[:B].reshape(B, C, H, W)


def _reference(x, w, b):
    """Pure-JAX reference mirroring the PyTorch forward exactly."""
    xf = x.astype(jnp.float32)
    max_pool = jnp.max(xf, axis=1, keepdims=True)
    avg_pool = jnp.mean(xf, axis=1, keepdims=True)
    cat = jnp.concatenate([max_pool, avg_pool], axis=1)          # (B, 2, H, W)
    conv = jax.lax.conv_general_dilated(
        cat, w.astype(jnp.float32), window_strides=(1, 1),
        padding=((3, 3), (3, 3)),
        dimension_numbers=("NCHW", "OIHW", "NCHW"))
    conv = conv + b.astype(jnp.float32).reshape(1, -1, 1, 1)
    ms = jax.nn.sigmoid(conv)
    return (ms * xf + xf).astype(x.dtype)


if __name__ == "__main__":
    key = jax.random.PRNGKey(0)
    kx, kw, kb = jax.random.split(key, 3)

    B, C, H, W = 2, 4, 16, 16
    x = jax.random.normal(kx, (B, C, H, W), dtype=jnp.float32)

    # Deterministic Conv2d(2, 1, 7, padding=3) parameters (PyTorch-style init).
    fan_in = 2 * 7 * 7
    bound = 1.0 / (fan_in ** 0.5)
    w = jax.random.uniform(kw, (1, 2, 7, 7), jnp.float32, -bound, bound)
    b = jax.random.uniform(kb, (1,), jnp.float32, -bound, bound)

    out = spatial_attention(x, w, b)
    out = jax.block_until_ready(out)

    ref = _reference(x, w, b)
    assert out.shape == x.shape and out.dtype == x.dtype
    max_err = float(jnp.max(jnp.abs(out - ref)))
    assert jnp.allclose(out, ref, atol=1e-4, rtol=1e-4), f"max_err={max_err}"

    print("KERNEL_OK")
</pallas_src>

<mosaic_0001>
module attributes {stable_mosaic.version = 11 : i64} {
  func.func @_spatial_attention_kernel(%arg0: i32, %arg1: memref<98xf32, #tpu.memory_space<smem>>, %arg2: memref<1xf32, #tpu.memory_space<smem>>, %arg3: memref<7x256xf32, #tpu.memory_space<vmem>>, %arg4: memref<2x4x256xf32, #tpu.memory_space<vmem>>, %arg5: memref<2x4x256xf32, #tpu.memory_space<vmem>>, %arg6: memref<2x2x512xf32, #tpu.memory_space<vmem>>) attributes {dimension_semantics = [#tpu.dimension_semantics<parallel>], iteration_bounds = array<i64: 1>, scalar_prefetch = 0 : i64, scratch_operands = 1 : i64, tpu.core_type = #tpu.core_type<tc>, window_params = [{transform_indices = @transform_0, window_bounds = array<i64: 98>}, {transform_indices = @transform_1, window_bounds = array<i64: 1>}, {pipeline_mode = #tpu.pipeline_mode<synchronous>, transform_indices = @transform_2, window_bounds = array<i64: 7, 256>}, {transform_indices = @transform_3, window_bounds = array<i64: 2, 4, 256>}, {transform_indices = @transform_4, window_bounds = array<i64: 2, 4, 256>}]} {
    %c0 = arith.constant 0 : index
    %c0_0 = arith.constant 0 : index
    %c0_1 = arith.constant 0 : index
    %0 = vector.load %arg4[%c0, %c0_0, %c0_1] : memref<2x4x256xf32, #tpu.memory_space<vmem>>, vector<2x4x256xf32>
    %cst = arith.constant dense<0xFF800000> : vector<2x256xf32>
    %1 = vector.multi_reduction <maximumf>, %0, %cst [1] : vector<2x4x256xf32> to vector<2x256xf32>
    %cst_2 = arith.constant dense<0.000000e+00> : vector<2x256xf32>
    %2 = vector.multi_reduction <add>, %0, %cst_2 [1] : vector<2x4x256xf32> to vector<2x256xf32>
    %cst_3 = arith.constant 4.000000e+00 : f32
    %3 = vector.broadcast %cst_3 : f32 to vector<2x256xf32>
    %4 = arith.divf %2, %3 : vector<2x256xf32>
    %cst_4 = arith.constant 0.000000e+00 : f32
    %5 = vector.broadcast %cst_4 : f32 to vector<2x2x128xf32>
    %c0_5 = arith.constant 0 : index
    %c0_6 = arith.constant 0 : index
    %c0_7 = arith.constant 0 : index
    %6 = vector.load %arg6[%c0_5, %c0_6, %c0_7] : memref<2x2x512xf32, #tpu.memory_space<vmem>>, vector<2x2x128xf32>
    tpu.vector_store %arg6[%c0_5, %c0_6, %c0_7], %5 {strides = array<i32>} : memref<2x2x512xf32, #tpu.memory_space<vmem>>, vector<2x2x128xf32>,
    %cst_8 = arith.constant 0.000000e+00 : f32
    %7 = vector.broadcast %cst_8 : f32 to vector<2x2x128xf32>
    %c0_9 = arith.constant 0 : index
    %c0_10 = arith.constant 0 : index
    %c384 = arith.constant 384 : index
    %8 = vector.load %arg6[%c0_9, %c0_10, %c384] : memref<2x2x512xf32, #tpu.memory_space<vmem>>, vector<2x2x128xf32>
    tpu.vector_store %arg6[%c0_9, %c0_10, %c384], %7 {strides = array<i32>} : memref<2x2x512xf32, #tpu.memory_space<vmem>>, vector<2x2x128xf32>,
    %c0_11 = arith.constant 0 : index
    %c0_12 = arith.constant 0 : index
    %c128 = arith.constant 128 : index
    %9 = vector.load %arg6[%c0_11, %c0_12, %c128] : memref<2x2x512xf32, #tpu.memory_space<vmem>>, vector<1x2x256xf32>
    %10 = vector.shape_cast %9 : vector<1x2x256xf32> to vector<2x256xf32>
    %11 = vector.shape_cast %1 : vector<2x256xf32> to vector<1x2x256xf32>
    tpu.vector_store %arg6[%c0_11, %c0_12, %c128], %11 {strides = array<i32>} : memref<2x2x512xf32, #tpu.memory_space<vmem>>, vector<1x2x256xf32>,
    %c1 = arith.constant 1 : index
    %c0_13 = arith.constant 0 : index
    %c128_14 = arith.constant 128 : index
    %12 = vector.load %arg6[%c1, %c0_13, %c128_14] : memref<2x2x512xf32, #tpu.memory_space<vmem>>, vector<1x2x256xf32>
    %13 = vector.shape_cast %12 : vector<1x2x256xf32> to vector<2x256xf32>
    %14 = vector.shape_cast %4 : vector<2x256xf32> to vector<1x2x256xf32>
    tpu.vector_store %arg6[%c1, %c0_13, %c128_14], %14 {strides = array<i32>} : memref<2x2x512xf32, #tpu.memory_space<vmem>>, vector<1x2x256xf32>,
    %c0_15 = arith.constant 0 : index
    %15 = memref.load %arg2[%c0_15] : memref<1xf32, #tpu.memory_space<smem>>
    %c0_16 = arith.constant 0 : index
    %16 = memref.load %arg1[%c0_16] : memref<98xf32, #tpu.memory_space<smem>>
    %c49 = arith.constant 49 : index
    %17 = memref.load %arg1[%c49] : memref<98xf32, #tpu.memory_space<smem>>
    %c0_17 = arith.constant 0 : index
    %c0_18 = arith.constant 0 : index
    %c77 = arith.constant 77 : index
    %18 = vector.load %arg6[%c0_17, %c0_18, %c77] : memref<2x2x512xf32, #tpu.memory_space<vmem>>, vector<1x2x256xf32>
    %19 = vector.shape_cast %18 : vector<1x2x256xf32> to vector<2x256xf32>
    %20 = vector.broadcast %16 : f32 to vector<2x256xf32>
    %21 = arith.mulf %20, %19 : vector<2x256xf32>
    %c1_19 = arith.constant 1 : index
    %c0_20 = arith.constant 0 : index
    %c77_21 = arith.constant 77 : index
    %22 = vector.load %arg6[%c1_19, %c0_20, %c77_21] : memref<2x2x512xf32, #tpu.memory_space<vmem>>, vector<1x2x256xf32>
    %23 = vector.shape_cast %22 : vector<1x2x256xf32> to vector<2x256xf32>
    %24 = vector.broadcast %17 : f32 to vector<2x256xf32>
    %25 = arith.mulf %24, %23 : vector<2x256xf32>
    %c7 = arith.constant 7 : index
    %26 = memref.load %arg1[%c7] : memref<98xf32, #tpu.memory_space<smem>>
    %c56 = arith.constant 56 : index
    %27 = memref.load %arg1[%c56] : memref<98xf32, #tpu.memory_space<smem>>
    %c0_22 = arith.constant 0 : index
    %c0_23 = arith.constant 0 : index
    %c93 = arith.constant 93 : index
    %28 = vector.load %arg6[%c0_22, %c0_23, %c93] : memref<2x2x512xf32, #tpu.memory_space<vmem>>, vector<1x2x256xf32>
    %29 = vector.shape_cast %28 : vector<1x2x256xf32> to vector<2x256xf32>
    %30 = vector.broadcast %26 : f32 to vector<2x256xf32>
    %31 = arith.mulf %30, %29 : vector<2x256xf32>
    %c1_24 = arith.constant 1 : index
    %c0_25 = arith.constant 0 : index
    %c93_26 = arith.constant 93 : index
    %32 = vector.load %arg6[%c1_24, %c0_25, %c93_26] : memref<2x2x512xf32, #tpu.memory_space<vmem>>, vector<1x2x256xf32>
    %33 = vector.shape_cast %32 : vector<1x2x256xf32> to vector<2x256xf32>
    %34 = vector.broadcast %27 : f32 to vector<2x256xf32>
    %35 = arith.mulf %34, %33 : vector<2x256xf32>
    %36 = arith.addf %21, %31 : vector<2x256xf32>
    %37 = arith.addf %25, %35 : vector<2x256xf32>
    %c14 = arith.constant 14 : index
    %38 = memref.load %arg1[%c14] : memref<98xf32, #tpu.memory_space<smem>>
    %c63 = arith.constant 63 : index
    %39 = memref.load %arg1[%c63] : memref<98xf32, #tpu.memory_space<smem>>
    %c0_27 = arith.constant 0 : index
    %c0_28 = arith.constant 0 : index
    %c109 = arith.constant 109 : index
    %40 = vector.load %arg6[%c0_27, %c0_28, %c109] : memref<2x2x512xf32, #tpu.memory_space<vmem>>, vector<1x2x256xf32>
    %41 = vector.shape_cast %40 : vector<1x2x256xf32> to vector<2x256xf32>
    %42 = vector.broadcast %38 : f32 to vector<2x256xf32>
    %43 = arith.mulf %42, %41 : vector<2x256xf32>
    %c1_29 = arith.constant 1 : index
    %c0_30 = arith.constant 0 : index
    %c109_31 = arith.constant 109 : index
    %44 = vector.load %arg6[%c1_29, %c0_30, %c109_31] : memref<2x2x512xf32, #tpu.memory_space<vmem>>, vector<1x2x256xf32>
    %45 = vector.shape_cast %44 : vector<1x2x256xf32> to vector<2x256xf32>
    %46 = vector.broadcast %39 : f32 to vector<2x256xf32>
    %47 = arith.mulf %46, %45 : vector<2x256xf32>
    %48 = arith.addf %36, %43 : vector<2x256xf32>
    %49 = arith.addf %37, %47 : vector<2x256xf32>
    %c21 = arith.constant 21 : index
    %50 = memref.load %arg1[%c21] : memref<98xf32, #tpu.memory_space<smem>>
    %c70 = arith.constant 70 : index
    %51 = memref.load %arg1[%c70] : memref<98xf32, #tpu.memory_space<smem>>
    %c0_32 = arith.constant 0 : index
    %c0_33 = arith.constant 0 : index
    %c125 = arith.constant 125 : index
    %52 = vector.load %arg6[%c0_32, %c0_33, %c125] : memref<2x2x512xf32, #tpu.memory_space<vmem>>, vector<1x2x256xf32>
    %53 = vector.shape_cast %52 : vector<1x2x256xf32> to vector<2x256xf32>
    %54 = vector.broadcast %50 : f32 to vector<2x256xf32>
    %55 = arith.mulf %54, %53 : vector<2x256xf32>
    %c1_34 = arith.constant 1 : index
    %c0_35 = arith.constant 0 : index
    %c125_36 = arith.constant 125 : index
    %56 = vector.load %arg6[%c1_34, %c0_35, %c125_36] : memref<2x2x512xf32, #tpu.memory_space<vmem>>, vector<1x2x256xf32>
    %57 = vector.shape_cast %56 : vector<1x2x256xf32> to vector<2x256xf32>
    %58 = vector.broadcast %51 : f32 to vector<2x256xf32>
    %59 = arith.mulf %58, %57 : vector<2x256xf32>
    %60 = arith.addf %48, %55 : vector<2x256xf32>
    %61 = arith.addf %49, %59 : vector<2x256xf32>
    %c28 = arith.constant 28 : index
    %62 = memref.load %arg1[%c28] : memref<98xf32, #tpu.memory_space<smem>>
    %c77_37 = arith.constant 77 : index
    %63 = memref.load %arg1[%c77_37] : memref<98xf32, #tpu.memory_space<smem>>
    %c0_38 = arith.constant 0 : index
    %c0_39 = arith.constant 0 : index
    %c141 = arith.constant 141 : index
    %64 = vector.load %arg6[%c0_38, %c0_39, %c141] : memref<2x2x512xf32, #tpu.memory_space<vmem>>, vector<1x2x256xf32>
    %65 = vector.shape_cast %64 : vector<1x2x256xf32> to vector<2x256xf32>
    %66 = vector.broadcast %62 : f32 to vector<2x256xf32>
    %67 = arith.mulf %66, %65 : vector<2x256xf32>
    %c1_40 = arith.constant 1 : index
    %c0_41 = arith.constant 0 : index
    %c141_42 = arith.constant 141 : index
    %68 = vector.load %arg6[%c1_40, %c0_41, %c141_42] : memref<2x2x512xf32, #tpu.memory_space<vmem>>, vector<1x2x256xf32>
    %69 = vector.shape_cast %68 : vector<1x2x256xf32> to vector<2x256xf32>
    %70 = vector.broadcast %63 : f32 to vector<2x256xf32>
    %71 = arith.mulf %70, %69 : vector<2x256xf32>
    %72 = arith.addf %60, %67 : vector<2x256xf32>
    %73 = arith.addf %61, %71 : vector<2x256xf32>
    %c35 = arith.constant 35 : index
    %74 = memref.load %arg1[%c35] : memref<98xf32, #tpu.memory_space<smem>>
    %c84 = arith.constant 84 : index
    %75 = memref.load %arg1[%c84] : memref<98xf32, #tpu.memory_space<smem>>
    %c0_43 = arith.constant 0 : index
    %c0_44 = arith.constant 0 : index
    %c157 = arith.constant 157 : index
    %76 = vector.load %arg6[%c0_43, %c0_44, %c157] : memref<2x2x512xf32, #tpu.memory_space<vmem>>, vector<1x2x256xf32>
    %77 = vector.shape_cast %76 : vector<1x2x256xf32> to vector<2x256xf32>
    %78 = vector.broadcast %74 : f32 to vector<2x256xf32>
    %79 = arith.mulf %78, %77 : vector<2x256xf32>
    %c1_45 = arith.constant 1 : index
    %c0_46 = arith.constant 0 : index
    %c157_47 = arith.constant 157 : index
    %80 = vector.load %arg6[%c1_45, %c0_46, %c157_47] : memref<2x2x512xf32, #tpu.memory_space<vmem>>, vector<1x2x256xf32>
    %81 = vector.shape_cast %80 : vector<1x2x256xf32> to vector<2x256xf32>
    %82 = vector.broadcast %75 : f32 to vector<2x256xf32>
    %83 = arith.mulf %82, %81 : vector<2x256xf32>
    %84 = arith.addf %72, %79 : vector<2x256xf32>
    %85 = arith.addf %73, %83 : vector<2x256xf32>
    %c42 = arith.constant 42 : index
    %86 = memref.load %arg1[%c42] : memref<98xf32, #tpu.memory_space<smem>>
    %c91 = arith.constant 91 : index
    %87 = memref.load %arg1[%c91] : memref<98xf32, #tpu.memory_space<smem>>
    %c0_48 = arith.constant 0 : index
    %c0_49 = arith.constant 0 : index
    %c173 = arith.constant 173 : index
    %88 = vector.load %arg6[%c0_48, %c0_49, %c173] : memref<2x2x512xf32, #tpu.memory_space<vmem>>, vector<1x2x256xf32>
    %89 = vector.shape_cast %88 : vector<1x2x256xf32> to vector<2x256xf32>
    %90 = vector.broadcast %86 : f32 to vector<2x256xf32>
    %91 = arith.mulf %90, %89 : vector<2x256xf32>
    %c1_50 = arith.constant 1 : index
    %c0_51 = arith.constant 0 : index
    %c173_52 = arith.constant 173 : index
    %92 = vector.load %arg6[%c1_50, %c0_51, %c173_52] : memref<2x2x512xf32, #tpu.memory_space<vmem>>, vector<1x2x256xf32>
    %93 = vector.shape_cast %92 : vector<1x2x256xf32> to vector<2x256xf32>
    %94 = vector.broadcast %87 : f32 to vector<2x256xf32>
    %95 = arith.mulf %94, %93 : vector<2x256xf32>
    %96 = arith.addf %84, %91 : vector<2x256xf32>
    %97 = arith.addf %85, %95 : vector<2x256xf32>
    %98 = arith.addf %96, %97 : vector<2x256xf32>
    %c0_53 = arith.constant 0 : index
    %c0_54 = arith.constant 0 : index
    %99 = vector.load %arg3[%c0_53, %c0_54] : memref<7x256xf32, #tpu.memory_space<vmem>>, vector<1x256xf32>
    %100 = vector.shape_cast %99 : vector<1x256xf32> to vector<256xf32>
    %101 = vector.shape_cast %100 : vector<256xf32> to vector<1x256xf32>
    %102 = vector.broadcast %101 : vector<1x256xf32> to vector<2x256xf32>
    %103 = arith.mulf %102, %98 : vector<2x256xf32>
    %c1_55 = arith.constant 1 : index
    %104 = memref.load %arg1[%c1_55] : memref<98xf32, #tpu.memory_space<smem>>
    %c50 = arith.constant 50 : index
    %105 = memref.load %arg1[%c50] : memref<98xf32, #tpu.memory_space<smem>>
    %c0_56 = arith.constant 0 : index
    %c0_57 = arith.constant 0 : index
    %c78 = arith.constant 78 : index
    %106 = vector.load %arg6[%c0_56, %c0_57, %c78] : memref<2x2x512xf32, #tpu.memory_space<vmem>>, vector<1x2x256xf32>
    %107 = vector.shape_cast %106 : vector<1x2x256xf32> to vector<2x256xf32>
    %108 = vector.broadcast %104 : f32 to vector<2x256xf32>
    %109 = arith.mulf %108, %107 : vector<2x256xf32>
    %c1_58 = arith.constant 1 : index
    %c0_59 = arith.constant 0 : index
    %c78_60 = arith.constant 78 : index
    %110 = vector.load %arg6[%c1_58, %c0_59, %c78_60] : memref<2x2x512xf32, #tpu.memory_space<vmem>>, vector<1x2x256xf32>
    %111 = vector.shape_cast %110 : vector<1x2x256xf32> to vector<2x256xf32>
    %112 = vector.broadcast %105 : f32 to vector<2x256xf32>
    %113 = arith.mulf %112, %111 : vector<2x256xf32>
    %c8 = arith.constant 8 : index
    %114 = memref.load %arg1[%c8] : memref<98xf32, #tpu.memory_space<smem>>
    %c57 = arith.constant 57 : index
    %115 = memref.load %arg1[%c57] : memref<98xf32, #tpu.memory_space<smem>>
    %c0_61 = arith.constant 0 : index
    %c0_62 = arith.constant 0 : index
    %c94 = arith.constant 94 : index
    %116 = vector.load %arg6[%c0_61, %c0_62, %c94] : memref<2x2x512xf32, #tpu.memory_space<vmem>>, vector<1x2x256xf32>
    %117 = vector.shape_cast %116 : vector<1x2x256xf32> to vector<2x256xf32>
    %118 = vector.broadcast %114 : f32 to vector<2x256xf32>
    %119 = arith.mulf %118, %117 : vector<2x256xf32>
    %c1_63 = arith.constant 1 : index
    %c0_64 = arith.constant 0 : index
    %c94_65 = arith.constant 94 : index
    %120 = vector.load %arg6[%c1_63, %c0_64, %c94_65] : memref<2x2x512xf32, #tpu.memory_space<vmem>>, vector<1x2x256xf32>
    %121 = vector.shape_cast %120 : vector<1x2x256xf32> to vector<2x256xf32>
    %122 = vector.broadcast %115 : f32 to vector<2x256xf32>
    %123 = arith.mulf %122, %121 : vector<2x256xf32>
    %124 = arith.addf %109, %119 : vector<2x256xf32>
    %125 = arith.addf %113, %123 : vector<2x256xf32>
    %c15 = arith.constant 15 : index
    %126 = memref.load %arg1[%c15] : memref<98xf32, #tpu.memory_space<smem>>
    %c64 = arith.constant 64 : index
    %127 = memref.load %arg1[%c64] : memref<98xf32, #tpu.memory_space<smem>>
    %c0_66 = arith.constant 0 : index
    %c0_67 = arith.constant 0 : index
    %c110 = arith.constant 110 : index
    %128 = vector.load %arg6[%c0_66, %c0_67, %c110] : memref<2x2x512xf32, #tpu.memory_space<vmem>>, vector<1x2x256xf32>
    %129 = vector.shape_cast %128 : vector<1x2x256xf32> to vector<2x256xf32>
    %130 = vector.broadcast %126 : f32 to vector<2x256xf32>
    %131 = arith.mulf %130, %129 : vector<2x256xf32>
    %c1_68 = arith.constant 1 : index
    %c0_69 = arith.constant 0 : index
    %c110_70 = arith.constant 110 : index
    %132 = vector.load %arg6[%c1_68, %c0_69, %c110_70] : memref<2x2x512xf32, #tpu.memory_space<vmem>>, vector<1x2x256xf32>
    %133 = vector.shape_cast %132 : vector<1x2x256xf32> to vector<2x256xf32>
    %134 = vector.broadcast %127 : f32 to vector<2x256xf32>
    %135 = arith.mulf %134, %133 : vector<2x256xf32>
    %136 = arith.addf %124, %131 : vector<2x256xf32>
    %137 = arith.addf %125, %135 : vector<2x256xf32>
    %c22 = arith.constant 22 : index
    %138 = memref.load %arg1[%c22] : memref<98xf32, #tpu.memory_space<smem>>
    %c71 = arith.constant 71 : index
    %139 = memref.load %arg1[%c71] : memref<98xf32, #tpu.memory_space<smem>>
    %c0_71 = arith.constant 0 : index
    %c0_72 = arith.constant 0 : index
    %c126 = arith.constant 126 : index
    %140 = vector.load %arg6[%c0_71, %c0_72, %c126] : memref<2x2x512xf32, #tpu.memory_space<vmem>>, vector<1x2x256xf32>
    %141 = vector.shape_cast %140 : vector<1x2x256xf32> to vector<2x256xf32>
    %142 = vector.broadcast %138 : f32 to vector<2x256xf32>
    %143 = arith.mulf %142, %141 : vector<2x256xf32>
    %c1_73 = arith.constant 1 : index
    %c0_74 = arith.constant 0 : index
    %c126_75 = arith.constant 126 : index
    %144 = vector.load %arg6[%c1_73, %c0_74, %c126_75] : memref<2x2x512xf32, #tpu.memory_space<vmem>>, vector<1x2x256xf32>
    %145 = vector.shape_cast %144 : vector<1x2x256xf32> to vector<2x256xf32>
    %146 = vector.broadcast %139 : f32 to vector<2x256xf32>
    %147 = arith.mulf %146, %145 : vector<2x256xf32>
    %148 = arith.addf %136, %143 : vector<2x256xf32>
    %149 = arith.addf %137, %147 : vector<2x256xf32>
    %c29 = arith.constant 29 : index
    %150 = memref.load %arg1[%c29] : memref<98xf32, #tpu.memory_space<smem>>
    %c78_76 = arith.constant 78 : index
    %151 = memref.load %arg1[%c78_76] : memref<98xf32, #tpu.memory_space<smem>>
    %c0_77 = arith.constant 0 : index
    %c0_78 = arith.constant 0 : index
    %c142 = arith.constant 142 : index
    %152 = vector.load %arg6[%c0_77, %c0_78, %c142] : memref<2x2x512xf32, #tpu.memory_space<vmem>>, vector<1x2x256xf32>
    %153 = vector.shape_cast %152 : vector<1x2x256xf32> to vector<2x256xf32>
    %154 = vector.broadcast %150 : f32 to vector<2x256xf32>
    %155 = arith.mulf %154, %153 : vector<2x256xf32>
    %c1_79 = arith.constant 1 : index
    %c0_80 = arith.constant 0 : index
    %c142_81 = arith.constant 142 : index
    %156 = vector.load %arg6[%c1_79, %c0_80, %c142_81] : memref<2x2x512xf32, #tpu.memory_space<vmem>>, vector<1x2x256xf32>
    %157 = vector.shape_cast %156 : vector<1x2x256xf32> to vector<2x256xf32>
    %158 = vector.broadcast %151 : f32 to vector<2x256xf32>
    %159 = arith.mulf %158, %157 : vector<2x256xf32>
    %160 = arith.addf %148, %155 : vector<2x256xf32>
    %161 = arith.addf %149, %159 : vector<2x256xf32>
    %c36 = arith.constant 36 : index
    %162 = memref.load %arg1[%c36] : memref<98xf32, #tpu.memory_space<smem>>
    %c85 = arith.constant 85 : index
    %163 = memref.load %arg1[%c85] : memref<98xf32, #tpu.memory_space<smem>>
    %c0_82 = arith.constant 0 : index
    %c0_83 = arith.constant 0 : index
    %c158 = arith.constant 158 : index
    %164 = vector.load %arg6[%c0_82, %c0_83, %c158] : memref<2x2x512xf32, #tpu.memory_space<vmem>>, vector<1x2x256xf32>
    %165 = vector.shape_cast %164 : vector<1x2x256xf32> to vector<2x256xf32>
    %166 = vector.broadcast %162 : f32 to vector<2x256xf32>
    %167 = arith.mulf %166, %165 : vector<2x256xf32>
    %c1_84 = arith.constant 1 : index
    %c0_85 = arith.constant 0 : index
    %c158_86 = arith.constant 158 : index
    %168 = vector.load %arg6[%c1_84, %c0_85, %c158_86] : memref<2x2x512xf32, #tpu.memory_space<vmem>>, vector<1x2x256xf32>
    %169 = vector.shape_cast %168 : vector<1x2x256xf32> to vector<2x256xf32>
    %170 = vector.broadcast %163 : f32 to vector<2x256xf32>
    %171 = arith.mulf %170, %169 : vector<2x256xf32>
    %172 = arith.addf %160, %167 : vector<2x256xf32>
    %173 = arith.addf %161, %171 : vector<2x256xf32>
    %c43 = arith.constant 43 : index
    %174 = memref.load %arg1[%c43] : memref<98xf32, #tpu.memory_space<smem>>
    %c92 = arith.constant 92 : index
    %175 = memref.load %arg1[%c92] : memref<98xf32, #tpu.memory_space<smem>>
    %c0_87 = arith.constant 0 : index
    %c0_88 = arith.constant 0 : index
    %c174 = arith.constant 174 : index
    %176 = vector.load %arg6[%c0_87, %c0_88, %c174] : memref<2x2x512xf32, #tpu.memory_space<vmem>>, vector<1x2x256xf32>
    %177 = vector.shape_cast %176 : vector<1x2x256xf32> to vector<2x256xf32>
    %178 = vector.broadcast %174 : f32 to vector<2x256xf32>
    %179 = arith.mulf %178, %177 : vector<2x256xf32>
    %c1_89 = arith.constant 1 : index
    %c0_90 = arith.constant 0 : index
    %c174_91 = arith.constant 174 : index
    %180 = vector.load %arg6[%c1_89, %c0_90, %c174_91] : memref<2x2x512xf32, #tpu.memory_space<vmem>>, vector<1x2x256xf32>
    %181 = vector.shape_cast %180 : vector<1x2x256xf32> to vector<2x256xf32>
    %182 = vector.broadcast %175 : f32 to vector<2x256xf32>
    %183 = arith.mulf %182, %181 : vector<2x256xf32>
    %184 = arith.addf %172, %179 : vector<2x256xf32>
    %185 = arith.addf %173, %183 : vector<2x256xf32>
    %186 = arith.addf %184, %185 : vector<2x256xf32>
    %c1_92 = arith.constant 1 : index
    %c0_93 = arith.constant 0 : index
    %187 = vector.load %arg3[%c1_92, %c0_93] : memref<7x256xf32, #tpu.memory_space<vmem>>, vector<1x256xf32>
    %188 = vector.shape_cast %187 : vector<1x256xf32> to vector<256xf32>
    %189 = vector.shape_cast %188 : vector<256xf32> to vector<1x256xf32>
    %190 = vector.broadcast %189 : vector<1x256xf32> to vector<2x256xf32>
    %191 = arith.mulf %190, %186 : vector<2x256xf32>
    %c2 = arith.constant 2 : index
    %192 = memref.load %arg1[%c2] : memref<98xf32, #tpu.memory_space<smem>>
    %c51 = arith.constant 51 : index
    %193 = memref.load %arg1[%c51] : memref<98xf32, #tpu.memory_space<smem>>
    %c0_94 = arith.constant 0 : index
    %c0_95 = arith.constant 0 : index
    %c79 = arith.constant 79 : index
    %194 = vector.load %arg6[%c0_94, %c0_95, %c79] : memref<2x2x512xf32, #tpu.memory_space<vmem>>, vector<1x2x256xf32>
    %195 = vector.shape_cast %194 : vector<1x2x256xf32> to vector<2x256xf32>
    %196 = vector.broadcast %192 : f32 to vector<2x256xf32>
    %197 = arith.mulf %196, %195 : vector<2x256xf32>
    %c1_96 = arith.constant 1 : index
    %c0_97 = arith.constant 0 : index
    %c79_98 = arith.constant 79 : index
    %198 = vector.load %arg6[%c1_96, %c0_97, %c79_98] : memref<2x2x512xf32, #tpu.memory_space<vmem>>, vector<1x2x256xf32>
    %199 = vector.shape_cast %198 : vector<1x2x256xf32> to vector<2x256xf32>
    %200 = vector.broadcast %193 : f32 to vector<2x256xf32>
    %201 = arith.mulf %200, %199 : vector<2x256xf32>
    %c9 = arith.constant 9 : index
    %202 = memref.load %arg1[%c9] : memref<98xf32, #tpu.memory_space<smem>>
    %c58 = arith.constant 58 : index
    %203 = memref.load %arg1[%c58] : memref<98xf32, #tpu.memory_space<smem>>
    %c0_99 = arith.constant 0 : index
    %c0_100 = arith.constant 0 : index
    %c95 = arith.constant 95 : index
    %204 = vector.load %arg6[%c0_99, %c0_100, %c95] : memref<2x2x512xf32, #tpu.memory_space<vmem>>, vector<1x2x256xf32>
    %205 = vector.shape_cast %204 : vector<1x2x256xf32> to vector<2x256xf32>
    %206 = vector.broadcast %202 : f32 to vector<2x256xf32>
    %207 = arith.mulf %206, %205 : vector<2x256xf32>
    %c1_101 = arith.constant 1 : index
    %c0_102 = arith.constant 0 : index
    %c95_103 = arith.constant 95 : index
    %208 = vector.load %arg6[%c1_101, %c0_102, %c95_103] : memref<2x2x512xf32, #tpu.memory_space<vmem>>, vector<1x2x256xf32>
    %209 = vector.shape_cast %208 : vector<1x2x256xf32> to vector<2x256xf32>
    %210 = vector.broadcast %203 : f32 to vector<2x256xf32>
    %211 = arith.mulf %210, %209 : vector<2x256xf32>
    %212 = arith.addf %197, %207 : vector<2x256xf32>
    %213 = arith.addf %201, %211 : vector<2x256xf32>
    %c16 = arith.constant 16 : index
    %214 = memref.load %arg1[%c16] : memref<98xf32, #tpu.memory_space<smem>>
    %c65 = arith.constant 65 : index
    %215 = memref.load %arg1[%c65] : memref<98xf32, #tpu.memory_space<smem>>
    %c0_104 = arith.constant 0 : index
    %c0_105 = arith.constant 0 : index
    %c111 = arith.constant 111 : index
    %216 = vector.load %arg6[%c0_104, %c0_105, %c111] : memref<2x2x512xf32, #tpu.memory_space<vmem>>, vector<1x2x256xf32>
    %217 = vector.shape_cast %216 : vector<1x2x256xf32> to vector<2x256xf32>
    %218 = vector.broadcast %214 : f32 to vector<2x256xf32>
    %219 = arith.mulf %218, %217 : vector<2x256xf32>
    %c1_106 = arith.constant 1 : index
    %c0_107 = arith.constant 0 : index
    %c111_108 = arith.constant 111 : index
    %220 = vector.load %arg6[%c1_106, %c0_107, %c111_108] : memref<2x2x512xf32, #tpu.memory_space<vmem>>, vector<1x2x256xf32>
    %221 = vector.shape_cast %220 : vector<1x2x256xf32> to vector<2x256xf32>
    %222 = vector.broadcast %215 : f32 to vector<2x256xf32>
    %223 = arith.mulf %222, %221 : vector<2x256xf32>
    %224 = arith.addf %212, %219 : vector<2x256xf32>
    %225 = arith.addf %213, %223 : vector<2x256xf32>
    %c23 = arith.constant 23 : index
    %226 = memref.load %arg1[%c23] : memref<98xf32, #tpu.memory_space<smem>>
    %c72 = arith.constant 72 : index
    %227 = memref.load %arg1[%c72] : memref<98xf32, #tpu.memory_space<smem>>
    %c0_109 = arith.constant 0 : index
    %c0_110 = arith.constant 0 : index
    %c127 = arith.constant 127 : index
    %228 = vector.load %arg6[%c0_109, %c0_110, %c127] : memref<2x2x512xf32, #tpu.memory_space<vmem>>, vector<1x2x256xf32>
    %229 = vector.shape_cast %228 : vector<1x2x256xf32> to vector<2x256xf32>
    %230 = vector.broadcast %226 : f32 to vector<2x256xf32>
    %231 = arith.mulf %230, %229 : vector<2x256xf32>
    %c1_111 = arith.constant 1 : index
    %c0_112 = arith.constant 0 : index
    %c127_113 = arith.constant 127 : index
    %232 = vector.load %arg6[%c1_111, %c0_112, %c127_113] : memref<2x2x512xf32, #tpu.memory_space<vmem>>, vector<1x2x256xf32>
    %233 = vector.shape_cast %232 : vector<1x2x256xf32> to vector<2x256xf32>
    %234 = vector.broadcast %227 : f32 to vector<2x256xf32>
    %235 = arith.mulf %234, %233 : vector<2x256xf32>
    %236 = arith.addf %224, %231 : vector<2x256xf32>
    %237 = arith.addf %225, %235 : vector<2x256xf32>
    %c30 = arith.constant 30 : index
    %238 = memref.load %arg1[%c30] : memref<98xf32, #tpu.memory_space<smem>>
    %c79_114 = arith.constant 79 : index
    %239 = memref.load %arg1[%c79_114] : memref<98xf32, #tpu.memory_space<smem>>
    %c0_115 = arith.constant 0 : index
    %c0_116 = arith.constant 0 : index
    %c143 = arith.constant 143 : index
    %240 = vector.load %arg6[%c0_115, %c0_116, %c143] : memref<2x2x512xf32, #tpu.memory_space<vmem>>, vector<1x2x256xf32>
    %241 = vector.shape_cast %240 : vector<1x2x256xf32> to vector<2x256xf32>
    %242 = vector.broadcast %238 : f32 to vector<2x256xf32>
    %243 = arith.mulf %242, %241 : vector<2x256xf32>
    %c1_117 = arith.constant 1 : index
    %c0_118 = arith.constant 0 : index
    %c143_119 = arith.constant 143 : index
    %244 = vector.load %arg6[%c1_117, %c0_118, %c143_119] : memref<2x2x512xf32, #tpu.memory_space<vmem>>, vector<1x2x256xf32>
    %245 = vector.shape_cast %244 : vector<1x2x256xf32> to vector<2x256xf32>
    %246 = vector.broadcast %239 : f32 to vector<2x256xf32>
    %247 = arith.mulf %246, %245 : vector<2x256xf32>
    %248 = arith.addf %236, %243 : vector<2x256xf32>
    %249 = arith.addf %237, %247 : vector<2x256xf32>
    %c37 = arith.constant 37 : index
    %250 = memref.load %arg1[%c37] : memref<98xf32, #tpu.memory_space<smem>>
    %c86 = arith.constant 86 : index
    %251 = memref.load %arg1[%c86] : memref<98xf32, #tpu.memory_space<smem>>
    %c0_120 = arith.constant 0 : index
    %c0_121 = arith.constant 0 : index
    %c159 = arith.constant 159 : index
    %252 = vector.load %arg6[%c0_120, %c0_121, %c159] : memref<2x2x512xf32, #tpu.memory_space<vmem>>, vector<1x2x256xf32>
    %253 = vector.shape_cast %252 : vector<1x2x256xf32> to vector<2x256xf32>
    %254 = vector.broadcast %250 : f32 to vector<2x256xf32>
    %255 = arith.mulf %254, %253 : vector<2x256xf32>
    %c1_122 = arith.constant 1 : index
    %c0_123 = arith.constant 0 : index
    %c159_124 = arith.constant 159 : index
    %256 = vector.load %arg6[%c1_122, %c0_123, %c159_124] : memref<2x2x512xf32, #tpu.memory_space<vmem>>, vector<1x2x256xf32>
    %257 = vector.shape_cast %256 : vector<1x2x256xf32> to vector<2x256xf32>
    %258 = vector.broadcast %251 : f32 to vector<2x256xf32>
    %259 = arith.mulf %258, %257 : vector<2x256xf32>
    %260 = arith.addf %248, %255 : vector<2x256xf32>
    %261 = arith.addf %249, %259 : vector<2x256xf32>
    %c44 = arith.constant 44 : index
    %262 = memref.load %arg1[%c44] : memref<98xf32, #tpu.memory_space<smem>>
    %c93_125 = arith.constant 93 : index
    %263 = memref.load %arg1[%c93_125] : memref<98xf32, #tpu.memory_space<smem>>
    %c0_126 = arith.constant 0 : index
    %c0_127 = arith.constant 0 : index
    %c175 = arith.constant 175 : index
    %264 = vector.load %arg6[%c0_126, %c0_127, %c175] : memref<2x2x512xf32, #tpu.memory_space<vmem>>, vector<1x2x256xf32>
    %265 = vector.shape_cast %264 : vector<1x2x256xf32> to vector<2x256xf32>
    %266 = vector.broadcast %262 : f32 to vector<2x256xf32>
    %267 = arith.mulf %266, %265 : vector<2x256xf32>
    %c1_128 = arith.constant 1 : index
    %c0_129 = arith.constant 0 : index
    %c175_130 = arith.constant 175 : index
    %268 = vector.load %arg6[%c1_128, %c0_129, %c175_130] : memref<2x2x512xf32, #tpu.memory_space<vmem>>, vector<1x2x256xf32>
    %269 = vector.shape_cast %268 : vector<1x2x256xf32> to vector<2x256xf32>
    %270 = vector.broadcast %263 : f32 to vector<2x256xf32>
    %271 = arith.mulf %270, %269 : vector<2x256xf32>
    %272 = arith.addf %260, %267 : vector<2x256xf32>
    %273 = arith.addf %261, %271 : vector<2x256xf32>
    %274 = arith.addf %272, %273 : vector<2x256xf32>
    %c2_131 = arith.constant 2 : index
    %c0_132 = arith.constant 0 : index
    %275 = vector.load %arg3[%c2_131, %c0_132] : memref<7x256xf32, #tpu.memory_space<vmem>>, vector<1x256xf32>
    %276 = vector.shape_cast %275 : vector<1x256xf32> to vector<256xf32>
    %277 = vector.shape_cast %276 : vector<256xf32> to vector<1x256xf32>
    %278 = vector.broadcast %277 : vector<1x256xf32> to vector<2x256xf32>
    %279 = arith.mulf %278, %274 : vector<2x256xf32>
    %c3 = arith.constant 3 : index
    %280 = memref.load %arg1[%c3] : memref<98xf32, #tpu.memory_space<smem>>
    %c52 = arith.constant 52 : index
    %281 = memref.load %arg1[%c52] : memref<98xf32, #tpu.memory_space<smem>>
    %c0_133 = arith.constant 0 : index
    %c0_134 = arith.constant 0 : index
    %c80 = arith.constant 80 : index
    %282 = vector.load %arg6[%c0_133, %c0_134, %c80] : memref<2x2x512xf32, #tpu.memory_space<vmem>>, vector<1x2x256xf32>
    %283 = vector.shape_cast %282 : vector<1x2x256xf32> to vector<2x256xf32>
    %284 = vector.broadcast %280 : f32 to vector<2x256xf32>
    %285 = arith.mulf %284, %283 : vector<2x256xf32>
    %c1_135 = arith.constant 1 : index
    %c0_136 = arith.constant 0 : index
    %c80_137 = arith.constant 80 : index
    %286 = vector.load %arg6[%c1_135, %c0_136, %c80_137] : memref<2x2x512xf32, #tpu.memory_space<vmem>>, vector<1x2x256xf32>
    %287 = vector.shape_cast %286 : vector<1x2x256xf32> to vector<2x256xf32>
    %288 = vector.broadcast %281 : f32 to vector<2x256xf32>
    %289 = arith.mulf %288, %287 : vector<2x256xf32>
    %c10 = arith.constant 10 : index
    %290 = memref.load %arg1[%c10] : memref<98xf32, #tpu.memory_space<smem>>
    %c59 = arith.constant 59 : index
    %291 = memref.load %arg1[%c59] : memref<98xf32, #tpu.memory_space<smem>>
    %c0_138 = arith.constant 0 : index
    %c0_139 = arith.constant 0 : index
    %c96 = arith.constant 96 : index
    %292 = vector.load %arg6[%c0_138, %c0_139, %c96] : memref<2x2x512xf32, #tpu.memory_space<vmem>>, vector<1x2x256xf32>
    %293 = vector.shape_cast %292 : vector<1x2x256xf32> to vector<2x256xf32>
    %294 = vector.broadcast %290 : f32 to vector<2x256xf32>
    %295 = arith.mulf %294, %293 : vector<2x256xf32>
    %c1_140 = arith.constant 1 : index
    %c0_141 = arith.constant 0 : index
    %c96_142 = arith.constant 96 : index
    %296 = vector.load %arg6[%c1_140, %c0_141, %c96_142] : memref<2x2x512xf32, #tpu.memory_space<vmem>>, vector<1x2x256xf32>
    %297 = vector.shape_cast %296 : vector<1x2x256xf32> to vector<2x256xf32>
    %298 = vector.broadcast %291 : f32 to vector<2x256xf32>
    %299 = arith.mulf %298, %297 : vector<2x256xf32>
    %300 = arith.addf %285, %295 : vector<2x256xf32>
    %301 = arith.addf %289, %299 : vector<2x256xf32>
    %c17 = arith.constant 17 : index
    %302 = memref.load %arg1[%c17] : memref<98xf32, #tpu.memory_space<smem>>
    %c66 = arith.constant 66 : index
    %303 = memref.load %arg1[%c66] : memref<98xf32, #tpu.memory_space<smem>>
    %c0_143 = arith.constant 0 : index
    %c0_144 = arith.constant 0 : index
    %c112 = arith.constant 112 : index
    %304 = vector.load %arg6[%c0_143, %c0_144, %c112] : memref<2x2x512xf32, #tpu.memory_space<vmem>>, vector<1x2x256xf32>
    %305 = vector.shape_cast %304 : vector<1x2x256xf32> to vector<2x256xf32>
    %306 = vector.broadcast %302 : f32 to vector<2x256xf32>
    %307 = arith.mulf %306, %305 : vector<2x256xf32>
    %c1_145 = arith.constant 1 : index
    %c0_146 = arith.constant 0 : index
    %c112_147 = arith.constant 112 : index
    %308 = vector.load %arg6[%c1_145, %c0_146, %c112_147] : memref<2x2x512xf32, #tpu.memory_space<vmem>>, vector<1x2x256xf32>
    %309 = vector.shape_cast %308 : vector<1x2x256xf32> to vector<2x256xf32>
    %310 = vector.broadcast %303 : f32 to vector<2x256xf32>
    %311 = arith.mulf %310, %309 : vector<2x256xf32>
    %312 = arith.addf %300, %307 : vector<2x256xf32>
    %313 = arith.addf %301, %311 : vector<2x256xf32>
    %c24 = arith.constant 24 : index
    %314 = memref.load %arg1[%c24] : memref<98xf32, #tpu.memory_space<smem>>
    %c73 = arith.constant 73 : index
    %315 = memref.load %arg1[%c73] : memref<98xf32, #tpu.memory_space<smem>>
    %c0_148 = arith.constant 0 : index
    %c0_149 = arith.constant 0 : index
    %c128_150 = arith.constant 128 : index
    %316 = vector.load %arg6[%c0_148, %c0_149, %c128_150] : memref<2x2x512xf32, #tpu.memory_space<vmem>>, vector<1x2x256xf32>
    %317 = vector.shape_cast %316 : vector<1x2x256xf32> to vector<2x256xf32>
    %318 = vector.broadcast %314 : f32 to vector<2x256xf32>
    %319 = arith.mulf %318, %317 : vector<2x256xf32>
    %c1_151 = arith.constant 1 : index
    %c0_152 = arith.constant 0 : index
    %c128_153 = arith.constant 128 : index
    %320 = vector.load %arg6[%c1_151, %c0_152, %c128_153] : memref<2x2x512xf32, #tpu.memory_space<vmem>>, vector<1x2x256xf32>
    %321 = vector.shape_cast %320 : vector<1x2x256xf32> to vector<2x256xf32>
    %322 = vector.broadcast %315 : f32 to vector<2x256xf32>
    %323 = arith.mulf %322, %321 : vector<2x256xf32>
    %324 = arith.addf %312, %319 : vector<2x256xf32>
    %325 = arith.addf %313, %323 : vector<2x256xf32>
    %c31 = arith.constant 31 : index
    %326 = memref.load %arg1[%c31] : memref<98xf32, #tpu.memory_space<smem>>
    %c80_154 = arith.constant 80 : index
    %327 = memref.load %arg1[%c80_154] : memref<98xf32, #tpu.memory_space<smem>>
    %c0_155 = arith.constant 0 : index
    %c0_156 = arith.constant 0 : index
    %c144 = arith.constant 144 : index
    %328 = vector.load %arg6[%c0_155, %c0_156, %c144] : memref<2x2x512xf32, #tpu.memory_space<vmem>>, vector<1x2x256xf32>
    %329 = vector.shape_cast %328 : vector<1x2x256xf32> to vector<2x256xf32>
    %330 = vector.broadcast %326 : f32 to vector<2x256xf32>
    %331 = arith.mulf %330, %329 : vector<2x256xf32>
    %c1_157 = arith.constant 1 : index
    %c0_158 = arith.constant 0 : index
    %c144_159 = arith.constant 144 : index
    %332 = vector.load %arg6[%c1_157, %c0_158, %c144_159] : memref<2x2x512xf32, #tpu.memory_space<vmem>>, vector<1x2x256xf32>
    %333 = vector.shape_cast %332 : vector<1x2x256xf32> to vector<2x256xf32>
    %334 = vector.broadcast %327 : f32 to vector<2x256xf32>
    %335 = arith.mulf %334, %333 : vector<2x256xf32>
    %336 = arith.addf %324, %331 : vector<2x256xf32>
    %337 = arith.addf %325, %335 : vector<2x256xf32>
    %c38 = arith.constant 38 : index
    %338 = memref.load %arg1[%c38] : memref<98xf32, #tpu.memory_space<smem>>
    %c87 = arith.constant 87 : index
    %339 = memref.load %arg1[%c87] : memref<98xf32, #tpu.memory_space<smem>>
    %c0_160 = arith.constant 0 : index
    %c0_161 = arith.constant 0 : index
    %c160 = arith.constant 160 : index
    %340 = vector.load %arg6[%c0_160, %c0_161, %c160] : memref<2x2x512xf32, #tpu.memory_space<vmem>>, vector<1x2x256xf32>
    %341 = vector.shape_cast %340 : vector<1x2x256xf32> to vector<2x256xf32>
    %342 = vector.broadcast %338 : f32 to vector<2x256xf32>
    %343 = arith.mulf %342, %341 : vector<2x256xf32>
    %c1_162 = arith.constant 1 : index
    %c0_163 = arith.constant 0 : index
    %c160_164 = arith.constant 160 : index
    %344 = vector.load %arg6[%c1_162, %c0_163, %c160_164] : memref<2x2x512xf32, #tpu.memory_space<vmem>>, vector<1x2x256xf32>
    %345 = vector.shape_cast %344 : vector<1x2x256xf32> to vector<2x256xf32>
    %346 = vector.broadcast %339 : f32 to vector<2x256xf32>
    %347 = arith.mulf %346, %345 : vector<2x256xf32>
    %348 = arith.addf %336, %343 : vector<2x256xf32>
    %349 = arith.addf %337, %347 : vector<2x256xf32>
    %c45 = arith.constant 45 : index
    %350 = memref.load %arg1[%c45] : memref<98xf32, #tpu.memory_space<smem>>
    %c94_165 = arith.constant 94 : index
    %351 = memref.load %arg1[%c94_165] : memref<98xf32, #tpu.memory_space<smem>>
    %c0_166 = arith.constant 0 : index
    %c0_167 = arith.constant 0 : index
    %c176 = arith.constant 176 : index
    %352 = vector.load %arg6[%c0_166, %c0_167, %c176] : memref<2x2x512xf32, #tpu.memory_space<vmem>>, vector<1x2x256xf32>
    %353 = vector.shape_cast %352 : vector<1x2x256xf32> to vector<2x256xf32>
    %354 = vector.broadcast %350 : f32 to vector<2x256xf32>
    %355 = arith.mulf %354, %353 : vector<2x256xf32>
    %c1_168 = arith.constant 1 : index
    %c0_169 = arith.constant 0 : index
    %c176_170 = arith.constant 176 : index
    %356 = vector.load %arg6[%c1_168, %c0_169, %c176_170] : memref<2x2x512xf32, #tpu.memory_space<vmem>>, vector<1x2x256xf32>
    %357 = vector.shape_cast %356 : vector<1x2x256xf32> to vector<2x256xf32>
    %358 = vector.broadcast %351 : f32 to vector<2x256xf32>
    %359 = arith.mulf %358, %357 : vector<2x256xf32>
    %360 = arith.addf %348, %355 : vector<2x256xf32>
    %361 = arith.addf %349, %359 : vector<2x256xf32>
    %362 = arith.addf %360, %361 : vector<2x256xf32>
    %c4 = arith.constant 4 : index
    %363 = memref.load %arg1[%c4] : memref<98xf32, #tpu.memory_space<smem>>
    %c53 = arith.constant 53 : index
    %364 = memref.load %arg1[%c53] : memref<98xf32, #tpu.memory_space<smem>>
    %c0_171 = arith.constant 0 : index
    %c0_172 = arith.constant 0 : index
    %c81 = arith.constant 81 : index
    %365 = vector.load %arg6[%c0_171, %c0_172, %c81] : memref<2x2x512xf32, #tpu.memory_space<vmem>>, vector<1x2x256xf32>
    %366 = vector.shape_cast %365 : vector<1x2x256xf32> to vector<2x256xf32>
    %367 = vector.broadcast %363 : f32 to vector<2x256xf32>
    %368 = arith.mulf %367, %366 : vector<2x256xf32>
    %c1_173 = arith.constant 1 : index
    %c0_174 = arith.constant 0 : index
    %c81_175 = arith.constant 81 : index
    %369 = vector.load %arg6[%c1_173, %c0_174, %c81_175] : memref<2x2x512xf32, #tpu.memory_space<vmem>>, vector<1x2x256xf32>
    %370 = vector.shape_cast %369 : vector<1x2x256xf32> to vector<2x256xf32>
    %371 = vector.broadcast %364 : f32 to vector<2x256xf32>
    %372 = arith.mulf %371, %370 : vector<2x256xf32>
    %c11 = arith.constant 11 : index
    %373 = memref.load %arg1[%c11] : memref<98xf32, #tpu.memory_space<smem>>
    %c60 = arith.constant 60 : index
    %374 = memref.load %arg1[%c60] : memref<98xf32, #tpu.memory_space<smem>>
    %c0_176 = arith.constant 0 : index
    %c0_177 = arith.constant 0 : index
    %c97 = arith.constant 97 : index
    %375 = vector.load %arg6[%c0_176, %c0_177, %c97] : memref<2x2x512xf32, #tpu.memory_space<vmem>>, vector<1x2x256xf32>
    %376 = vector.shape_cast %375 : vector<1x2x256xf32> to vector<2x256xf32>
    %377 = vector.broadcast %373 : f32 to vector<2x256xf32>
    %378 = arith.mulf %377, %376 : vector<2x256xf32>
    %c1_178 = arith.constant 1 : index
    %c0_179 = arith.constant 0 : index
    %c97_180 = arith.constant 97 : index
    %379 = vector.load %arg6[%c1_178, %c0_179, %c97_180] : memref<2x2x512xf32, #tpu.memory_space<vmem>>, vector<1x2x256xf32>
    %380 = vector.shape_cast %379 : vector<1x2x256xf32> to vector<2x256xf32>
    %381 = vector.broadcast %374 : f32 to vector<2x256xf32>
    %382 = arith.mulf %381, %380 : vector<2x256xf32>
    %383 = arith.addf %368, %378 : vector<2x256xf32>
    %384 = arith.addf %372, %382 : vector<2x256xf32>
    %c18 = arith.constant 18 : index
    %385 = memref.load %arg1[%c18] : memref<98xf32, #tpu.memory_space<smem>>
    %c67 = arith.constant 67 : index
    %386 = memref.load %arg1[%c67] : memref<98xf32, #tpu.memory_space<smem>>
    %c0_181 = arith.constant 0 : index
    %c0_182 = arith.constant 0 : index
    %c113 = arith.constant 113 : index
    %387 = vector.load %arg6[%c0_181, %c0_182, %c113] : memref<2x2x512xf32, #tpu.memory_space<vmem>>, vector<1x2x256xf32>
    %388 = vector.shape_cast %387 : vector<1x2x256xf32> to vector<2x256xf32>
    %389 = vector.broadcast %385 : f32 to vector<2x256xf32>
    %390 = arith.mulf %389, %388 : vector<2x256xf32>
    %c1_183 = arith.constant 1 : index
    %c0_184 = arith.constant 0 : index
    %c113_185 = arith.constant 113 : index
    %391 = vector.load %arg6[%c1_183, %c0_184, %c113_185] : memref<2x2x512xf32, #tpu.memory_space<vmem>>, vector<1x2x256xf32>
    %392 = vector.shape_cast %391 : vector<1x2x256xf32> to vector<2x256xf32>
    %393 = vector.broadcast %386 : f32 to vector<2x256xf32>
    %394 = arith.mulf %393, %392 : vector<2x256xf32>
    %395 = arith.addf %383, %390 : vector<2x256xf32>
    %396 = arith.addf %384, %394 : vector<2x256xf32>
    %c25 = arith.constant 25 : index
    %397 = memref.load %arg1[%c25] : memref<98xf32, #tpu.memory_space<smem>>
    %c74 = arith.constant 74 : index
    %398 = memref.load %arg1[%c74] : memref<98xf32, #tpu.memory_space<smem>>
    %c0_186 = arith.constant 0 : index
    %c0_187 = arith.constant 0 : index
    %c129 = arith.constant 129 : index
    %399 = vector.load %arg6[%c0_186, %c0_187, %c129] : memref<2x2x512xf32, #tpu.memory_space<vmem>>, vector<1x2x256xf32>
    %400 = vector.shape_cast %399 : vector<1x2x256xf32> to vector<2x256xf32>
    %401 = vector.broadcast %397 : f32 to vector<2x256xf32>
    %402 = arith.mulf %401, %400 : vector<2x256xf32>
    %c1_188 = arith.constant 1 : index
    %c0_189 = arith.constant 0 : index
    %c129_190 = arith.constant 129 : index
    %403 = vector.load %arg6[%c1_188, %c0_189, %c129_190] : memref<2x2x512xf32, #tpu.memory_space<vmem>>, vector<1x2x256xf32>
    %404 = vector.shape_cast %403 : vector<1x2x256xf32> to vector<2x256xf32>
    %405 = vector.broadcast %398 : f32 to vector<2x256xf32>
    %406 = arith.mulf %405, %404 : vector<2x256xf32>
    %407 = arith.addf %395, %402 : vector<2x256xf32>
    %408 = arith.addf %396, %406 : vector<2x256xf32>
    %c32 = arith.constant 32 : index
    %409 = memref.load %arg1[%c32] : memref<98xf32, #tpu.memory_space<smem>>
    %c81_191 = arith.constant 81 : index
    %410 = memref.load %arg1[%c81_191] : memref<98xf32, #tpu.memory_space<smem>>
    %c0_192 = arith.constant 0 : index
    %c0_193 = arith.constant 0 : index
    %c145 = arith.constant 145 : index
    %411 = vector.load %arg6[%c0_192, %c0_193, %c145] : memref<2x2x512xf32, #tpu.memory_space<vmem>>, vector<1x2x256xf32>
    %412 = vector.shape_cast %411 : vector<1x2x256xf32> to vector<2x256xf32>
    %413 = vector.broadcast %409 : f32 to vector<2x256xf32>
    %414 = arith.mulf %413, %412 : vector<2x256xf32>
    %c1_194 = arith.constant 1 : index
    %c0_195 = arith.constant 0 : index
    %c145_196 = arith.constant 145 : index
    %415 = vector.load %arg6[%c1_194, %c0_195, %c145_196] : memref<2x2x512xf32, #tpu.memory_space<vmem>>, vector<1x2x256xf32>
    %416 = vector.shape_cast %415 : vector<1x2x256xf32> to vector<2x256xf32>
    %417 = vector.broadcast %410 : f32 to vector<2x256xf32>
    %418 = arith.mulf %417, %416 : vector<2x256xf32>
    %419 = arith.addf %407, %414 : vector<2x256xf32>
    %420 = arith.addf %408, %418 : vector<2x256xf32>
    %c39 = arith.constant 39 : index
    %421 = memref.load %arg1[%c39] : memref<98xf32, #tpu.memory_space<smem>>
    %c88 = arith.constant 88 : index
    %422 = memref.load %arg1[%c88] : memref<98xf32, #tpu.memory_space<smem>>
    %c0_197 = arith.constant 0 : index
    %c0_198 = arith.constant 0 : index
    %c161 = arith.constant 161 : index
    %423 = vector.load %arg6[%c0_197, %c0_198, %c161] : memref<2x2x512xf32, #tpu.memory_space<vmem>>, vector<1x2x256xf32>
    %424 = vector.shape_cast %423 : vector<1x2x256xf32> to vector<2x256xf32>
    %425 = vector.broadcast %421 : f32 to vector<2x256xf32>
    %426 = arith.mulf %425, %424 : vector<2x256xf32>
    %c1_199 = arith.constant 1 : index
    %c0_200 = arith.constant 0 : index
    %c161_201 = arith.constant 161 : index
    %427 = vector.load %arg6[%c1_199, %c0_200, %c161_201] : memref<2x2x512xf32, #tpu.memory_space<vmem>>, vector<1x2x256xf32>
    %428 = vector.shape_cast %427 : vector<1x2x256xf32> to vector<2x256xf32>
    %429 = vector.broadcast %422 : f32 to vector<2x256xf32>
    %430 = arith.mulf %429, %428 : vector<2x256xf32>
    %431 = arith.addf %419, %426 : vector<2x256xf32>
    %432 = arith.addf %420, %430 : vector<2x256xf32>
    %c46 = arith.constant 46 : index
    %433 = memref.load %arg1[%c46] : memref<98xf32, #tpu.memory_space<smem>>
    %c95_202 = arith.constant 95 : index
    %434 = memref.load %arg1[%c95_202] : memref<98xf32, #tpu.memory_space<smem>>
    %c0_203 = arith.constant 0 : index
    %c0_204 = arith.constant 0 : index
    %c177 = arith.constant 177 : index
    %435 = vector.load %arg6[%c0_203, %c0_204, %c177] : memref<2x2x512xf32, #tpu.memory_space<vmem>>, vector<1x2x256xf32>
    %436 = vector.shape_cast %435 : vector<1x2x256xf32> to vector<2x256xf32>
    %437 = vector.broadcast %433 : f32 to vector<2x256xf32>
    %438 = arith.mulf %437, %436 : vector<2x256xf32>
    %c1_205 = arith.constant 1 : index
    %c0_206 = arith.constant 0 : index
    %c177_207 = arith.constant 177 : index
    %439 = vector.load %arg6[%c1_205, %c0_206, %c177_207] : memref<2x2x512xf32, #tpu.memory_space<vmem>>, vector<1x2x256xf32>
    %440 = vector.shape_cast %439 : vector<1x2x256xf32> to vector<2x256xf32>
    %441 = vector.broadcast %434 : f32 to vector<2x256xf32>
    %442 = arith.mulf %441, %440 : vector<2x256xf32>
    %443 = arith.addf %431, %438 : vector<2x256xf32>
    %444 = arith.addf %432, %442 : vector<2x256xf32>
    %445 = arith.addf %443, %444 : vector<2x256xf32>
    %c4_208 = arith.constant 4 : index
    %c0_209 = arith.constant 0 : index
    %446 = vector.load %arg3[%c4_208, %c0_209] : memref<7x256xf32, #tpu.memory_space<vmem>>, vector<1x256xf32>
    %447 = vector.shape_cast %446 : vector<1x256xf32> to vector<256xf32>
    %448 = vector.shape_cast %447 : vector<256xf32> to vector<1x256xf32>
    %449 = vector.broadcast %448 : vector<1x256xf32> to vector<2x256xf32>
    %450 = arith.mulf %449, %445 : vector<2x256xf32>
    %c5 = arith.constant 5 : index
    %451 = memref.load %arg1[%c5] : memref<98xf32, #tpu.memory_space<smem>>
    %c54 = arith.constant 54 : index
    %452 = memref.load %arg1[%c54] : memref<98xf32, #tpu.memory_space<smem>>
    %c0_210 = arith.constant 0 : index
    %c0_211 = arith.constant 0 : index
    %c82 = arith.constant 82 : index
    %453 = vector.load %arg6[%c0_210, %c0_211, %c82] : memref<2x2x512xf32, #tpu.memory_space<vmem>>, vector<1x2x256xf32>
    %454 = vector.shape_cast %453 : vector<1x2x256xf32> to vector<2x256xf32>
    %455 = vector.broadcast %451 : f32 to vector<2x256xf32>
    %456 = arith.mulf %455, %454 : vector<2x256xf32>
    %c1_212 = arith.constant 1 : index
    %c0_213 = arith.constant 0 : index
    %c82_214 = arith.constant 82 : index
    %457 = vector.load %arg6[%c1_212, %c0_213, %c82_214] : memref<2x2x512xf32, #tpu.memory_space<vmem>>, vector<1x2x256xf32>
    %458 = vector.shape_cast %457 : vector<1x2x256xf32> to vector<2x256xf32>
    %459 = vector.broadcast %452 : f32 to vector<2x256xf32>
    %460 = arith.mulf %459, %458 : vector<2x256xf32>
    %c12 = arith.constant 12 : index
    %461 = memref.load %arg1[%c12] : memref<98xf32, #tpu.memory_space<smem>>
    %c61 = arith.constant 61 : index
    %462 = memref.load %arg1[%c61] : memref<98xf32, #tpu.memory_space<smem>>
    %c0_215 = arith.constant 0 : index
    %c0_216 = arith.constant 0 : index
    %c98 = arith.constant 98 : index
    %463 = vector.load %arg6[%c0_215, %c0_216, %c98] : memref<2x2x512xf32, #tpu.memory_space<vmem>>, vector<1x2x256xf32>
    %464 = vector.shape_cast %463 : vector<1x2x256xf32> to vector<2x256xf32>
    %465 = vector.broadcast %461 : f32 to vector<2x256xf32>
    %466 = arith.mulf %465, %464 : vector<2x256xf32>
    %c1_217 = arith.constant 1 : index
    %c0_218 = arith.constant 0 : index
    %c98_219 = arith.constant 98 : index
    %467 = vector.load %arg6[%c1_217, %c0_218, %c98_219] : memref<2x2x512xf32, #tpu.memory_space<vmem>>, vector<1x2x256xf32>
    %468 = vector.shape_cast %467 : vector<1x2x256xf32> to vector<2x256xf32>
    %469 = vector.broadcast %462 : f32 to vector<2x256xf32>
    %470 = arith.mulf %469, %468 : vector<2x256xf32>
    %471 = arith.addf %456, %466 : vector<2x256xf32>
    %472 = arith.addf %460, %470 : vector<2x256xf32>
    %c19 = arith.constant 19 : index
    %473 = memref.load %arg1[%c19] : memref<98xf32, #tpu.memory_space<smem>>
    %c68 = arith.constant 68 : index
    %474 = memref.load %arg1[%c68] : memref<98xf32, #tpu.memory_space<smem>>
    %c0_220 = arith.constant 0 : index
    %c0_221 = arith.constant 0 : index
    %c114 = arith.constant 114 : index
    %475 = vector.load %arg6[%c0_220, %c0_221, %c114] : memref<2x2x512xf32, #tpu.memory_space<vmem>>, vector<1x2x256xf32>
    %476 = vector.shape_cast %475 : vector<1x2x256xf32> to vector<2x256xf32>
    %477 = vector.broadcast %473 : f32 to vector<2x256xf32>
    %478 = arith.mulf %477, %476 : vector<2x256xf32>
    %c1_222 = arith.constant 1 : index
    %c0_223 = arith.constant 0 : index
    %c114_224 = arith.constant 114 : index
    %479 = vector.load %arg6[%c1_222, %c0_223, %c114_224] : memref<2x2x512xf32, #tpu.memory_space<vmem>>, vector<1x2x256xf32>
    %480 = vector.shape_cast %479 : vector<1x2x256xf32> to vector<2x256xf32>
    %481 = vector.broadcast %474 : f32 to vector<2x256xf32>
    %482 = arith.mulf %481, %480 : vector<2x256xf32>
    %483 = arith.addf %471, %478 : vector<2x256xf32>
    %484 = arith.addf %472, %482 : vector<2x256xf32>
    %c26 = arith.constant 26 : index
    %485 = memref.load %arg1[%c26] : memref<98xf32, #tpu.memory_space<smem>>
    %c75 = arith.constant 75 : index
    %486 = memref.load %arg1[%c75] : memref<98xf32, #tpu.memory_space<smem>>
    %c0_225 = arith.constant 0 : index
    %c0_226 = arith.constant 0 : index
    %c130 = arith.constant 130 : index
    %487 = vector.load %arg6[%c0_225, %c0_226, %c130] : memref<2x2x512xf32, #tpu.memory_space<vmem>>, vector<1x2x256xf32>
    %488 = vector.shape_cast %487 : vector<1x2x256xf32> to vector<2x256xf32>
    %489 = vector.broadcast %485 : f32 to vector<2x256xf32>
    %490 = arith.mulf %489, %488 : vector<2x256xf32>
    %c1_227 = arith.constant 1 : index
    %c0_228 = arith.constant 0 : index
    %c130_229 = arith.constant 130 : index
    %491 = vector.load %arg6[%c1_227, %c0_228, %c130_229] : memref<2x2x512xf32, #tpu.memory_space<vmem>>, vector<1x2x256xf32>
    %492 = vector.shape_cast %491 : vector<1x2x256xf32> to vector<2x256xf32>
    %493 = vector.broadcast %486 : f32 to vector<2x256xf32>
    %494 = arith.mulf %493, %492 : vector<2x256xf32>
    %495 = arith.addf %483, %490 : vector<2x256xf32>
    %496 = arith.addf %484, %494 : vector<2x256xf32>
    %c33 = arith.constant 33 : index
    %497 = memref.load %arg1[%c33] : memref<98xf32, #tpu.memory_space<smem>>
    %c82_230 = arith.constant 82 : index
    %498 = memref.load %arg1[%c82_230] : memref<98xf32, #tpu.memory_space<smem>>
    %c0_231 = arith.constant 0 : index
    %c0_232 = arith.constant 0 : index
    %c146 = arith.constant 146 : index
    %499 = vector.load %arg6[%c0_231, %c0_232, %c146] : memref<2x2x512xf32, #tpu.memory_space<vmem>>, vector<1x2x256xf32>
    %500 = vector.shape_cast %499 : vector<1x2x256xf32> to vector<2x256xf32>
    %501 = vector.broadcast %497 : f32 to vector<2x256xf32>
    %502 = arith.mulf %501, %500 : vector<2x256xf32>
    %c1_233 = arith.constant 1 : index
    %c0_234 = arith.constant 0 : index
    %c146_235 = arith.constant 146 : index
    %503 = vector.load %arg6[%c1_233, %c0_234, %c146_235] : memref<2x2x512xf32, #tpu.memory_space<vmem>>, vector<1x2x256xf32>
    %504 = vector.shape_cast %503 : vector<1x2x256xf32> to vector<2x256xf32>
    %505 = vector.broadcast %498 : f32 to vector<2x256xf32>
    %506 = arith.mulf %505, %504 : vector<2x256xf32>
    %507 = arith.addf %495, %502 : vector<2x256xf32>
    %508 = arith.addf %496, %506 : vector<2x256xf32>
    %c40 = arith.constant 40 : index
    %509 = memref.load %arg1[%c40] : memref<98xf32, #tpu.memory_space<smem>>
    %c89 = arith.constant 89 : index
    %510 = memref.load %arg1[%c89] : memref<98xf32, #tpu.memory_space<smem>>
    %c0_236 = arith.constant 0 : index
    %c0_237 = arith.constant 0 : index
    %c162 = arith.constant 162 : index
    %511 = vector.load %arg6[%c0_236, %c0_237, %c162] : memref<2x2x512xf32, #tpu.memory_space<vmem>>, vector<1x2x256xf32>
    %512 = vector.shape_cast %511 : vector<1x2x256xf32> to vector<2x256xf32>
    %513 = vector.broadcast %509 : f32 to vector<2x256xf32>
    %514 = arith.mulf %513, %512 : vector<2x256xf32>
    %c1_238 = arith.constant 1 : index
    %c0_239 = arith.constant 0 : index
    %c162_240 = arith.constant 162 : index
    %515 = vector.load %arg6[%c1_238, %c0_239, %c162_240] : memref<2x2x512xf32, #tpu.memory_space<vmem>>, vector<1x2x256xf32>
    %516 = vector.shape_cast %515 : vector<1x2x256xf32> to vector<2x256xf32>
    %517 = vector.broadcast %510 : f32 to vector<2x256xf32>
    %518 = arith.mulf %517, %516 : vector<2x256xf32>
    %519 = arith.addf %507, %514 : vector<2x256xf32>
    %520 = arith.addf %508, %518 : vector<2x256xf32>
    %c47 = arith.constant 47 : index
    %521 = memref.load %arg1[%c47] : memref<98xf32, #tpu.memory_space<smem>>
    %c96_241 = arith.constant 96 : index
    %522 = memref.load %arg1[%c96_241] : memref<98xf32, #tpu.memory_space<smem>>
    %c0_242 = arith.constant 0 : index
    %c0_243 = arith.constant 0 : index
    %c178 = arith.constant 178 : index
    %523 = vector.load %arg6[%c0_242, %c0_243, %c178] : memref<2x2x512xf32, #tpu.memory_space<vmem>>, vector<1x2x256xf32>
    %524 = vector.shape_cast %523 : vector<1x2x256xf32> to vector<2x256xf32>
    %525 = vector.broadcast %521 : f32 to vector<2x256xf32>
    %526 = arith.mulf %525, %524 : vector<2x256xf32>
    %c1_244 = arith.constant 1 : index
    %c0_245 = arith.constant 0 : index
    %c178_246 = arith.constant 178 : index
    %527 = vector.load %arg6[%c1_244, %c0_245, %c178_246] : memref<2x2x512xf32, #tpu.memory_space<vmem>>, vector<1x2x256xf32>
    %528 = vector.shape_cast %527 : vector<1x2x256xf32> to vector<2x256xf32>
    %529 = vector.broadcast %522 : f32 to vector<2x256xf32>
    %530 = arith.mulf %529, %528 : vector<2x256xf32>
    %531 = arith.addf %519, %526 : vector<2x256xf32>
    %532 = arith.addf %520, %530 : vector<2x256xf32>
    %533 = arith.addf %531, %532 : vector<2x256xf32>
    %c5_247 = arith.constant 5 : index
    %c0_248 = arith.constant 0 : index
    %534 = vector.load %arg3[%c5_247, %c0_248] : memref<7x256xf32, #tpu.memory_space<vmem>>, vector<1x256xf32>
    %535 = vector.shape_cast %534 : vector<1x256xf32> to vector<256xf32>
    %536 = vector.shape_cast %535 : vector<256xf32> to vector<1x256xf32>
    %537 = vector.broadcast %536 : vector<1x256xf32> to vector<2x256xf32>
    %538 = arith.mulf %537, %533 : vector<2x256xf32>
    %c6 = arith.constant 6 : index
    %539 = memref.load %arg1[%c6] : memref<98xf32, #tpu.memory_space<smem>>
    %c55 = arith.constant 55 : index
    %540 = memref.load %arg1[%c55] : memref<98xf32, #tpu.memory_space<smem>>
    %c0_249 = arith.constant 0 : index
    %c0_250 = arith.constant 0 : index
    %c83 = arith.constant 83 : index
    %541 = vector.load %arg6[%c0_249, %c0_250, %c83] : memref<2x2x512xf32, #tpu.memory_space<vmem>>, vector<1x2x256xf32>
    %542 = vector.shape_cast %541 : vector<1x2x256xf32> to vector<2x256xf32>
    %543 = vector.broadcast %539 : f32 to vector<2x256xf32>
    %544 = arith.mulf %543, %542 : vector<2x256xf32>
    %c1_251 = arith.constant 1 : index
    %c0_252 = arith.constant 0 : index
    %c83_253 = arith.constant 83 : index
    %545 = vector.load %arg6[%c1_251, %c0_252, %c83_253] : memref<2x2x512xf32, #tpu.memory_space<vmem>>, vector<1x2x256xf32>
    %546 = vector.shape_cast %545 : vector<1x2x256xf32> to vector<2x256xf32>
    %547 = vector.broadcast %540 : f32 to vector<2x256xf32>
    %548 = arith.mulf %547, %546 : vector<2x256xf32>
    %c13 = arith.constant 13 : index
    %549 = memref.load %arg1[%c13] : memref<98xf32, #tpu.memory_space<smem>>
    %c62 = arith.constant 62 : index
    %550 = memref.load %arg1[%c62] : memref<98xf32, #tpu.memory_space<smem>>
    %c0_254 = arith.constant 0 : index
    %c0_255 = arith.constant 0 : index
    %c99 = arith.constant 99 : index
    %551 = vector.load %arg6[%c0_254, %c0_255, %c99] : memref<2x2x512xf32, #tpu.memory_space<vmem>>, vector<1x2x256xf32>
    %552 = vector.shape_cast %551 : vector<1x2x256xf32> to vector<2x256xf32>
    %553 = vector.broadcast %549 : f32 to vector<2x256xf32>
    %554 = arith.mulf %553, %552 : vector<2x256xf32>
    %c1_256 = arith.constant 1 : index
    %c0_257 = arith.constant 0 : index
    %c99_258 = arith.constant 99 : index
    %555 = vector.load %arg6[%c1_256, %c0_257, %c99_258] : memref<2x2x512xf32, #tpu.memory_space<vmem>>, vector<1x2x256xf32>
    %556 = vector.shape_cast %555 : vector<1x2x256xf32> to vector<2x256xf32>
    %557 = vector.broadcast %550 : f32 to vector<2x256xf32>
    %558 = arith.mulf %557, %556 : vector<2x256xf32>
    %559 = arith.addf %544, %554 : vector<2x256xf32>
    %560 = arith.addf %548, %558 : vector<2x256xf32>
    %c20 = arith.constant 20 : index
    %561 = memref.load %arg1[%c20] : memref<98xf32, #tpu.memory_space<smem>>
    %c69 = arith.constant 69 : index
    %562 = memref.load %arg1[%c69] : memref<98xf32, #tpu.memory_space<smem>>
    %c0_259 = arith.constant 0 : index
    %c0_260 = arith.constant 0 : index
    %c115 = arith.constant 115 : index
    %563 = vector.load %arg6[%c0_259, %c0_260, %c115] : memref<2x2x512xf32, #tpu.memory_space<vmem>>, vector<1x2x256xf32>
    %564 = vector.shape_cast %563 : vector<1x2x256xf32> to vector<2x256xf32>
    %565 = vector.broadcast %561 : f32 to vector<2x256xf32>
    %566 = arith.mulf %565, %564 : vector<2x256xf32>
    %c1_261 = arith.constant 1 : index
    %c0_262 = arith.constant 0 : index
    %c115_263 = arith.constant 115 : index
    %567 = vector.load %arg6[%c1_261, %c0_262, %c115_263] : memref<2x2x512xf32, #tpu.memory_space<vmem>>, vector<1x2x256xf32>
    %568 = vector.shape_cast %567 : vector<1x2x256xf32> to vector<2x256xf32>
    %569 = vector.broadcast %562 : f32 to vector<2x256xf32>
    %570 = arith.mulf %569, %568 : vector<2x256xf32>
    %571 = arith.addf %559, %566 : vector<2x256xf32>
    %572 = arith.addf %560, %570 : vector<2x256xf32>
    %c27 = arith.constant 27 : index
    %573 = memref.load %arg1[%c27] : memref<98xf32, #tpu.memory_space<smem>>
    %c76 = arith.constant 76 : index
    %574 = memref.load %arg1[%c76] : memref<98xf32, #tpu.memory_space<smem>>
    %c0_264 = arith.constant 0 : index
    %c0_265 = arith.constant 0 : index
    %c131 = arith.constant 131 : index
    %575 = vector.load %arg6[%c0_264, %c0_265, %c131] : memref<2x2x512xf32, #tpu.memory_space<vmem>>, vector<1x2x256xf32>
    %576 = vector.shape_cast %575 : vector<1x2x256xf32> to vector<2x256xf32>
    %577 = vector.broadcast %573 : f32 to vector<2x256xf32>
    %578 = arith.mulf %577, %576 : vector<2x256xf32>
    %c1_266 = arith.constant 1 : index
    %c0_267 = arith.constant 0 : index
    %c131_268 = arith.constant 131 : index
    %579 = vector.load %arg6[%c1_266, %c0_267, %c131_268] : memref<2x2x512xf32, #tpu.memory_space<vmem>>, vector<1x2x256xf32>
    %580 = vector.shape_cast %579 : vector<1x2x256xf32> to vector<2x256xf32>
    %581 = vector.broadcast %574 : f32 to vector<2x256xf32>
    %582 = arith.mulf %581, %580 : vector<2x256xf32>
    %583 = arith.addf %571, %578 : vector<2x256xf32>
    %584 = arith.addf %572, %582 : vector<2x256xf32>
    %c34 = arith.constant 34 : index
    %585 = memref.load %arg1[%c34] : memref<98xf32, #tpu.memory_space<smem>>
    %c83_269 = arith.constant 83 : index
    %586 = memref.load %arg1[%c83_269] : memref<98xf32, #tpu.memory_space<smem>>
    %c0_270 = arith.constant 0 : index
    %c0_271 = arith.constant 0 : index
    %c147 = arith.constant 147 : index
    %587 = vector.load %arg6[%c0_270, %c0_271, %c147] : memref<2x2x512xf32, #tpu.memory_space<vmem>>, vector<1x2x256xf32>
    %588 = vector.shape_cast %587 : vector<1x2x256xf32> to vector<2x256xf32>
    %589 = vector.broadcast %585 : f32 to vector<2x256xf32>
    %590 = arith.mulf %589, %588 : vector<2x256xf32>
    %c1_272 = arith.constant 1 : index
    %c0_273 = arith.constant 0 : index
    %c147_274 = arith.constant 147 : index
    %591 = vector.load %arg6[%c1_272, %c0_273, %c147_274] : memref<2x2x512xf32, #tpu.memory_space<vmem>>, vector<1x2x256xf32>
    %592 = vector.shape_cast %591 : vector<1x2x256xf32> to vector<2x256xf32>
    %593 = vector.broadcast %586 : f32 to vector<2x256xf32>
    %594 = arith.mulf %593, %592 : vector<2x256xf32>
    %595 = arith.addf %583, %590 : vector<2x256xf32>
    %596 = arith.addf %584, %594 : vector<2x256xf32>
    %c41 = arith.constant 41 : index
    %597 = memref.load %arg1[%c41] : memref<98xf32, #tpu.memory_space<smem>>
    %c90 = arith.constant 90 : index
    %598 = memref.load %arg1[%c90] : memref<98xf32, #tpu.memory_space<smem>>
    %c0_275 = arith.constant 0 : index
    %c0_276 = arith.constant 0 : index
    %c163 = arith.constant 163 : index
    %599 = vector.load %arg6[%c0_275, %c0_276, %c163] : memref<2x2x512xf32, #tpu.memory_space<vmem>>, vector<1x2x256xf32>
    %600 = vector.shape_cast %599 : vector<1x2x256xf32> to vector<2x256xf32>
    %601 = vector.broadcast %597 : f32 to vector<2x256xf32>
    %602 = arith.mulf %601, %600 : vector<2x256xf32>
    %c1_277 = arith.constant 1 : index
    %c0_278 = arith.constant 0 : index
    %c163_279 = arith.constant 163 : index
    %603 = vector.load %arg6[%c1_277, %c0_278, %c163_279] : memref<2x2x512xf32, #tpu.memory_space<vmem>>, vector<1x2x256xf32>
    %604 = vector.shape_cast %603 : vector<1x2x256xf32> to vector<2x256xf32>
    %605 = vector.broadcast %598 : f32 to vector<2x256xf32>
    %606 = arith.mulf %605, %604 : vector<2x256xf32>
    %607 = arith.addf %595, %602 : vector<2x256xf32>
    %608 = arith.addf %596, %606 : vector<2x256xf32>
    %c48 = arith.constant 48 : index
    %609 = memref.load %arg1[%c48] : memref<98xf32, #tpu.memory_space<smem>>
    %c97_280 = arith.constant 97 : index
    %610 = memref.load %arg1[%c97_280] : memref<98xf32, #tpu.memory_space<smem>>
    %c0_281 = arith.constant 0 : index
    %c0_282 = arith.constant 0 : index
    %c179 = arith.constant 179 : index
    %611 = vector.load %arg6[%c0_281, %c0_282, %c179] : memref<2x2x512xf32, #tpu.memory_space<vmem>>, vector<1x2x256xf32>
    %612 = vector.shape_cast %611 : vector<1x2x256xf32> to vector<2x256xf32>
    %613 = vector.broadcast %609 : f32 to vector<2x256xf32>
    %614 = arith.mulf %613, %612 : vector<2x256xf32>
    %c1_283 = arith.constant 1 : index
    %c0_284 = arith.constant 0 : index
    %c179_285 = arith.constant 179 : index
    %615 = vector.load %arg6[%c1_283, %c0_284, %c179_285] : memref<2x2x512xf32, #tpu.memory_space<vmem>>, vector<1x2x256xf32>
    %616 = vector.shape_cast %615 : vector<1x2x256xf32> to vector<2x256xf32>
    %617 = vector.broadcast %610 : f32 to vector<2x256xf32>
    %618 = arith.mulf %617, %616 : vector<2x256xf32>
    %619 = arith.addf %607, %614 : vector<2x256xf32>
    %620 = arith.addf %608, %618 : vector<2x256xf32>
    %621 = arith.addf %619, %620 : vector<2x256xf32>
    %c6_286 = arith.constant 6 : index
    %c0_287 = arith.constant 0 : index
    %622 = vector.load %arg3[%c6_286, %c0_287] : memref<7x256xf32, #tpu.memory_space<vmem>>, vector<1x256xf32>
    %623 = vector.shape_cast %622 : vector<1x256xf32> to vector<256xf32>
    %624 = vector.shape_cast %623 : vector<256xf32> to vector<1x256xf32>
    %625 = vector.broadcast %624 : vector<1x256xf32> to vector<2x256xf32>
    %626 = arith.mulf %625, %621 : vector<2x256xf32>
    %627 = arith.addf %103, %191 : vector<2x256xf32>
    %628 = arith.addf %279, %362 : vector<2x256xf32>
    %629 = arith.addf %450, %538 : vector<2x256xf32>
    %630 = arith.addf %627, %628 : vector<2x256xf32>
    %631 = arith.addf %629, %626 : vector<2x256xf32>
    %632 = arith.addf %630, %631 : vector<2x256xf32>
    %633 = vector.broadcast %15 : f32 to vector<2x256xf32>
    %634 = arith.addf %632, %633 : vector<2x256xf32>
    %635 = arith.negf %634 : vector<2x256xf32>
    %636 = math.exp %635 : vector<2x256xf32>
    %cst_288 = arith.constant 1.000000e+00 : f32
    %637 = vector.broadcast %cst_288 : f32 to vector<2x256xf32>
    %638 = arith.addf %637, %636 : vector<2x256xf32>
    %639 = arith.divf %637, %638 : vector<2x256xf32>
    %cst_289 = arith.constant 1.000000e+00 : f32
    %640 = vector.broadcast %cst_289 : f32 to vector<2x256xf32>
    %641 = arith.addf %639, %640 : vector<2x256xf32>
    %c0_290 = arith.constant 0 : index
    %c0_291 = arith.constant 0 : index
    %c0_292 = arith.constant 0 : index
    %642 = vector.load %arg4[%c0_290, %c0_291, %c0_292] : memref<2x4x256xf32, #tpu.memory_space<vmem>>, vector<2x4x256xf32>
    %643 = vector.shape_cast %641 : vector<2x256xf32> to vector<2x1x256xf32>
    %644 = vector.broadcast %643 : vector<2x1x256xf32> to vector<2x4x256xf32>
    %645 = arith.mulf %642, %644 : vector<2x4x256xf32>
    %c0_293 = arith.constant 0 : index
    %c0_294 = arith.constant 0 : index
    %c0_295 = arith.constant 0 : index
    %646 = vector.load %arg5[%c0_293, %c0_294, %c0_295] : memref<2x4x256xf32, #tpu.memory_space<vmem>>, vector<2x4x256xf32>
    tpu.vector_store %arg5[%c0_293, %c0_294, %c0_295], %645 {strides = array<i32>} : memref<2x4x256xf32, #tpu.memory_space<vmem>>, vector<2x4x256xf32>,
    return
  }
  func.func @transform_0(%arg0: i32) -> i32 {
    %c0_i32 = arith.constant 0 : i32
    %c0_i32_0 = arith.constant 0 : i32
    return %c0_i32 : i32
  }
  func.func @transform_1(%arg0: i32) -> i32 {
    %c0_i32 = arith.constant 0 : i32
    %c0_i32_0 = arith.constant 0 : i32
    return %c0_i32 : i32
  }
  func.func @transform_2(%arg0: i32) -> (i32, i32) {
    %c0_i32 = arith.constant 0 : i32
    %c0_i32_0 = arith.constant 0 : i32
    %c0_i32_1 = arith.constant 0 : i32
    return %c0_i32, %c0_i32_0 : i32, i32
  }
  func.func @transform_3(%arg0: i32) -> (i32, i32, i32) {
    %c0_i32 = arith.constant 0 : i32
    %c0_i32_0 = arith.constant 0 : i32
    %c0_i32_1 = arith.constant 0 : i32
    return %arg0, %c0_i32, %c0_i32_0 : i32, i32, i32
  }
  func.func @transform_4(%arg0: i32) -> (i32, i32, i32) {
    %c0_i32 = arith.constant 0 : i32
    %c0_i32_0 = arith.constant 0 : i32
    %c0_i32_1 = arith.constant 0 : i32
    return %arg0, %c0_i32, %c0_i32_0 : i32, i32, i32
  }
}

</mosaic_0001>

<llo_original>
// kernel: tpu_custom_call.1
$region0: #{tpu_custom_call.1}
  #allocation0 [shape = 'u32[]', space=smem, size = 0x4, offset = 0x4, fixed_abs, tag = 'smem constant byte address 0x4 - core index']
  #allocation1 [shape = 'u32[144,128]{1,0:T(1,128)}', space=vmem, size = 0x12000, scoped, tag = 'internal scratch']
  #allocation2 [shape = 'f32[2,2,512]{2,1,0:T(2,128)}', space=vmem, size = 0x2000, scoped, tag = 'scratch operand']
  #allocation3 [shape = 'f32[1]{0:T(128)S(6)}', space=smem, size = 0x200, scoped, tag = 'scoped memory for tpu_custom_call.1']
  %s0 = inlined_call_operand.vmem [shape: f32[98], index: 0, kind: input, shape index: {}]
  %s1 = inlined_call_operand.<no memory space> [shape: f32[1], index: 1, kind: input, shape index: {}]
  %s2 = inlined_call_operand.hbm [shape: f32[7,256], index: 2, kind: input, shape index: {}]
  %s3 = inlined_call_operand.hbm [shape: f32[2,4,256], index: 3, kind: input, shape index: {}]
  %s4 = inlined_call_operand.hbm [shape: f32[2,4,256], index: 4, kind: output, shape index: {}]
  %s5 = sld [smem:[#allocation0]]
  $region38: #{tpu_custom_call.1} parent=0
    _
  %s7 = ssub.s32 1, %s5
  %s8 = scalar_select 0, %s7, %s5
  %9 = sst [smem:[#allocation3]] %s1
  $region1: #{tpu_custom_call.1} parent=0
    #allocation4 [shape = 'u8[512]{0}', space=smem, size = 0x200, scoped, tag = 'input window, operand 0, single buffered']
    #allocation5 [shape = 's32[1]{0}', space=sflag, size = 0x4, scoped, tag = 'scoped memory for tpu_custom_call.1']
    #allocation6 [shape = 's32[1]{0}', space=sflag, size = 0x4, scoped, tag = 'scoped memory for tpu_custom_call.1']
    #allocation7 [shape = 's32[1]{0}', space=sflag, size = 0x4, scoped, tag = 'scoped memory for tpu_custom_call.1']
    #allocation8 [shape = 'u8[8192]{0}', space=vmem, size = 0x2000, scoped, tag = 'input window, operand 2, single buffered']
    #allocation9 [shape = 'u8[8192]{0}', space=vmem, size = 0x2000, scoped, tag = 'input window, operand 3, single buffered']
    #allocation10 [shape = 's32[1]{0}', space=sflag, size = 0x4, scoped, tag = 'scoped memory for tpu_custom_call.1']
    #allocation11 [shape = 'u8[8192]{0}', space=vmem, size = 0x2000, scoped, tag = 'output window, operand 0, single buffered']
    %10 = vsyncpa [#allocation7], 0
    %11 = vsyncpa [#allocation5], 0
    %12 = vsyncpa [#allocation10], 0
    %13 = vsyncpa [#allocation6], 0
    // Predicated region
    $region2: #{tpu_custom_call.1} parent=1 // pred_check
      _
    $region3: #{tpu_custom_call.1} parent=1 // pred_check_branch
      %15 = sbr.rel (0) target = $region5
    $region4: #{tpu_custom_call.1} parent=1 // pred_region
      %s17 = ssub.s32 16, 16
      %18 = vsyncadd [#allocation7], %s17
      %s20 = sshll.u32 %s0, 4
      %s21 = int_to_ptr.vmem [resolvable:$true] %s20
      %23 = dma.vmem_to_smem %s21, 16, [#allocation4], [#allocation7]
    $region5: #{tpu_custom_call.1} parent=1 // pred_fallthru
      _
    // Predicated region
    $region6: #{tpu_custom_call.1} parent=1 // pred_check
      _
    $region7: #{tpu_custom_call.1} parent=1 // pred_check_branch
      %25 = sbr.rel (0) target = $region9
    $region8: #{tpu_custom_call.1} parent=1 // pred_region
      _
    $region9: #{tpu_custom_call.1} parent=1 // pred_fallthru
      _
    // Predicated region
    $region10: #{tpu_custom_call.1} parent=1 // pred_check
      _
    $region11: #{tpu_custom_call.1} parent=1 // pred_check_branch
      %27 = sbr.rel (0) target = $region13
    $region12: #{tpu_custom_call.1} parent=1 // pred_region
      %s29 = ssub.s32 256, 256
      %30 = vsyncadd [#allocation5], %s29
      %s32 = sshll.u32 [#allocation8], 4
      %s33 = int_to_ptr.vmem [resolvable:$true] %s32
      %35 = dma.hbm_to_vmem [thread:$0]  %s2, 256, %s33, [#allocation5]
    $region13: #{tpu_custom_call.1} parent=1 // pred_fallthru
      _
    // Predicated region
    $region14: #{tpu_custom_call.1} parent=1 // pred_check
      _
    $region15: #{tpu_custom_call.1} parent=1 // pred_check_branch
      %37 = sbr.rel (0) target = $region17
    $region16: #{tpu_custom_call.1} parent=1 // pred_region
      %s39 = ssub.s32 256, 256
      %40 = vsyncadd [#allocation10], %s39
      %s41 = sshll.u32 [#allocation9], 4
      %s42 = int_to_ptr.vmem [resolvable:$true] %s41
      %47 = dma.hbm_to_vmem [thread:$0]  %s3, 256, %s42, [#allocation10], 128, 128, 8
    $region17: #{tpu_custom_call.1} parent=1 // pred_fallthru
      _
    // Predicated region
    $region18: #{tpu_custom_call.1} parent=1 // pred_check
      _
    $region19: #{tpu_custom_call.1} parent=1 // pred_check_branch
      %49 = sbr.rel (0) target = $region21
    $region20: #{tpu_custom_call.1} parent=1 // pred_region
      %50 = dma.done [#allocation7], 16
    $region21: #{tpu_custom_call.1} parent=1 // pred_fallthru
      _
    // Predicated region
    $region22: #{tpu_custom_call.1} parent=1 // pred_check
      _
    $region23: #{tpu_custom_call.1} parent=1 // pred_check_branch
      %52 = sbr.rel (0) target = $region25
    $region24: #{tpu_custom_call.1} parent=1 // pred_region
      %53 = dma.done [#allocation5], 256
    $region25: #{tpu_custom_call.1} parent=1 // pred_fallthru
      _
    // Predicated region
    $region26: #{tpu_custom_call.1} parent=1 // pred_check
      _
    $region27: #{tpu_custom_call.1} parent=1 // pred_check_branch
      %55 = sbr.rel (0) target = $region29
    $region28: #{tpu_custom_call.1} parent=1 // pred_region
      %56 = dma.done [#allocation10], 256
    $region29: #{tpu_custom_call.1} parent=1 // pred_fallthru
      _
    %57 = sfence
    %v58 = vld [vmem:[#allocation9] sm:$0xff]
    %v59 = vld [vmem:[#allocation9 + $0x8] sm:$0xff]
    %v62 = vcombine.high %v58, %v58
    %v63 = vcombine.high %v59, %v59
    %vm66 = vcmask 1043456
    %v67 = vsel %vm66, %v58, -inf
    %v68 = vrot.slane %v67, 4
    %v69 = vmax.f32 %v67, %v68
    %v70 = vrot.slane %v69, 2
    %v71 = vmax.f32 %v69, %v70
    %v72 = vrot.slane %v71, 1
    %v73 = vmax.f32 %v71, %v72
    %v74 = vsel %vm66, %v62, -inf
    %v75 = vrot.slane %v74, 4
    %v76 = vmax.f32 %v74, %v75
    %v77 = vrot.slane %v76, 2
    %v78 = vmax.f32 %v76, %v77
    %v79 = vrot.slane %v78, 1
    %v80 = vmax.f32 %v78, %v79
    %v81 = vsel %vm66, %v59, -inf
    %v82 = vrot.slane %v81, 4
    %v83 = vmax.f32 %v81, %v82
    %v84 = vrot.slane %v83, 2
    %v85 = vmax.f32 %v83, %v84
    %v86 = vrot.slane %v85, 1
    %v87 = vmax.f32 %v85, %v86
    %v88 = vsel %vm66, %v63, -inf
    %v89 = vrot.slane %v88, 4
    %v90 = vmax.f32 %v88, %v89
    %v91 = vrot.slane %v90, 2
    %v92 = vmax.f32 %v90, %v91
    %v93 = vrot.slane %v92, 1
    %v94 = vmax.f32 %v92, %v93
    %v95 = vsel %vm66, %v58, 0.0
    %v96 = vrot.slane %v95, 4
    %v97 = vadd.f32 %v95, %v96
    %v98 = vrot.slane %v97, 2
    %v99 = vadd.f32 %v97, %v98
    %v100 = vrot.slane %v99, 1
    %v101 = vadd.f32 %v99, %v100
    %v102 = vsel %vm66, %v62, 0.0
    %v103 = vrot.slane %v102, 4
    %v104 = vadd.f32 %v102, %v103
    %v105 = vrot.slane %v104, 2
    %v106 = vadd.f32 %v104, %v105
    %v107 = vrot.slane %v106, 1
    %v108 = vadd.f32 %v106, %v107
    %v109 = vsel %vm66, %v59, 0.0
    %v110 = vrot.slane %v109, 4
    %v111 = vadd.f32 %v109, %v110
    %v112 = vrot.slane %v111, 2
    %v113 = vadd.f32 %v111, %v112
    %v114 = vrot.slane %v113, 1
    %v115 = vadd.f32 %v113, %v114
    %v116 = vsel %vm66, %v63, 0.0
    %v117 = vrot.slane %v116, 4
    %v118 = vadd.f32 %v116, %v117
    %v119 = vrot.slane %v118, 2
    %v120 = vadd.f32 %v118, %v119
    %v121 = vrot.slane %v120, 1
    %v122 = vadd.f32 %v120, %v121
    %v123 = vrcp.pop 4.0
    %v124 = vmul.f32 %v101, %v123
    %v125 = vmul.f32 %v108, %v123
    %v126 = vmul.f32 %v115, %v123
    %v127 = vmul.f32 %v122, %v123
    %128 = vst [vmem:[#allocation2] sm:$0x3] 0.0
    %129 = vst [vmem:[#allocation2 + $0x8] sm:$0x3] 0.0
    %130 = vst [vmem:[#allocation2 + $0x6] sm:$0x3] 0.0
    %131 = vst [vmem:[#allocation2 + $0xe] sm:$0x3] 0.0
    %v136 = vcombine.low %v73, %v80
    %v138 = vunpack.c.l.s4 1983009808
    %v139 = vunpack.c.0.s8 %v138
    %v140 = vlaneseq
    %v141 = vshrl.u32 %v140, 7
    %v142 = vsub.s32 %v139, %v141
    %v143 = vrot.slane %v136, %v142
    %v144 = vcombine.low %v87, %v94
    %v146 = vunpack.c.l.s4 1983009808
    %v147 = vunpack.c.0.s8 %v146
    %v148 = vlaneseq
    %v149 = vshrl.u32 %v148, 7
    %v150 = vsub.s32 %v147, %v149
    %v151 = vrot.slane %v144, %v150
    %vm152 = vcmask 1044484
    %v153 = vsel %vm152, %v143, %v143
    %vm154 = vcmask 1046534
    %v155 = vsel %vm154, %v143, %v153
    %v156 = vrot.slane %v151, 7
    %vm157 = vcmask 1041409
    %v158 = vsel %vm157, %v156, %v155
    %vm159 = vcmask 1043459
    %v160 = vsel %vm159, %v156, %v158
    %vm161 = vcmask 1045509
    %v162 = vsel %vm161, %v156, %v160
    %vm163 = vcmask 1047559
    %v164 = vsel %vm163, %v156, %v162
    %166 = vst [vmem:[#allocation2 + $0x2] sm:$0xf] %v164
    %v171 = vcombine.low %v124, %v125
    %v173 = vunpack.c.l.s4 1983009808
    %v174 = vunpack.c.0.s8 %v173
    %v175 = vlaneseq
    %v176 = vshrl.u32 %v175, 7
    %v177 = vsub.s32 %v174, %v176
    %v178 = vrot.slane %v171, %v177
    %v179 = vcombine.low %v126, %v127
    %v181 = vunpack.c.l.s4 1983009808
    %v182 = vunpack.c.0.s8 %v181
    %v183 = vlaneseq
    %v184 = vshrl.u32 %v183, 7
    %v185 = vsub.s32 %v182, %v184
    %v186 = vrot.slane %v179, %v185
    %v187 = vsel %vm152, %v178, %v178
    %v188 = vsel %vm154, %v178, %v187
    %v189 = vrot.slane %v186, 7
    %v190 = vsel %vm157, %v189, %v188
    %v191 = vsel %vm159, %v189, %v190
    %v192 = vsel %vm161, %v189, %v191
    %v193 = vsel %vm163, %v189, %v192
    %s195 = scalar_lea.vmem [#allocation2], 8
    %196 = vst [vmem:[%s195 + $0x2] sm:$0xf] %v193
    %s197 = sld [smem:[#allocation3]]
    %s198 = sld [smem:[#allocation4]]
    %s199 = sld [smem:[#allocation4 + $0x31]]
    %v200 = vld [vmem:[#allocation2] sm:$0x3f]
    %v201 = vstv %s198
    %v202 = vmul.f32 %v201, %v200
    %v203 = vld [vmem:[%s195] sm:$0x3f]
    %v204 = vstv %s199
    %v205 = vmul.f32 %v204, %v203
    %s206 = sld [smem:[#allocation4 + $0x7]]
    %s207 = sld [smem:[#allocation4 + $0x38]]
    %v208 = vstv %s206
    %v209 = vmul.f32 %v208, %v200
    %v210 = vstv %s207
    %v211 = vmul.f32 %v210, %v203
    %213 = vrot.lane.b32.xlu0 %v209, 112
    %v214 = vpop.permute.xlu0 %213
    %v215 = vrot.slane %v214, 2
    %vm216 = vcmask 916480
    %v217 = vsel %vm216, %v214, %v215
    %v219 = vadd.f32 %v202, %v217
    %221 = vrot.lane.b32.xlu0 %v211, 112
    %v222 = vpop.permute.xlu0 %221
    %v223 = vrot.slane %v222, 2
    %v224 = vsel %vm216, %v222, %v223
    %v226 = vadd.f32 %v205, %v224
    %s227 = sld [smem:[#allocation4 + $0xe]]
    %s228 = sld [smem:[#allocation4 + $0x3f]]
    %v229 = vstv %s227
    %v230 = vmul.f32 %v229, %v200
    %v231 = vstv %s228
    %v232 = vmul.f32 %v231, %v203
    %234 = vrot.lane.b32.xlu0 %v230, 96
    %v235 = vpop.permute.xlu0 %234
    %v236 = vrot.slane %v235, 2
    %vm237 = vcmask 785408
    %v238 = vsel %vm237, %v235, %v236
    %v240 = vadd.f32 %v219, %v238
    %242 = vrot.lane.b32.xlu0 %v232, 96
    %v243 = vpop.permute.xlu0 %242
    %v244 = vrot.slane %v243, 2
    %v245 = vsel %vm237, %v243, %v244
    %v247 = vadd.f32 %v226, %v245
    %s248 = sld [smem:[#allocation4 + $0x15]]
    %s249 = sld [smem:[#allocation4 + $0x46]]
    %v250 = vstv %s248
    %v251 = vmul.f32 %v250, %v200
    %v252 = vstv %s249
    %v253 = vmul.f32 %v252, %v203
    %255 = vrot.lane.b32.xlu0 %v251, 80
    %v256 = vpop.permute.xlu0 %255
    %v257 = vrot.slane %v256, 2
    %vm258 = vcmask 654336
    %v259 = vsel %vm258, %v256, %v257
    %v261 = vadd.f32 %v240, %v259
    %263 = vrot.lane.b32.xlu0 %v253, 80
    %v264 = vpop.permute.xlu0 %263
    %v265 = vrot.slane %v264, 2
    %v266 = vsel %vm258, %v264, %v265
    %v268 = vadd.f32 %v247, %v266
    %s269 = sld [smem:[#allocation4 + $0x1c]]
    %s270 = sld [smem:[#allocation4 + $0x4d]]
    %v271 = vld [vmem:[#allocation2 + $0x2] sm:$0x3f]
    %v272 = vstv %s269
    %v273 = vmul.f32 %v272, %v271
    %v274 = vld [vmem:[%s195 + $0x2] sm:$0x3f]
    %v275 = vstv %s270
    %v276 = vmul.f32 %v275, %v274
    %278 = vrot.lane.b32.xlu0 %v273, 64
    %v279 = vpop.permute.xlu0 %278
    %v280 = vrot.slane %v279, 6
    %vm281 = vcmask 523264
    %v282 = vsel %vm281, %v280, %v279
    %v284 = vadd.f32 %v261, %v282
    %286 = vrot.lane.b32.xlu0 %v276, 64
    %v287 = vpop.permute.xlu0 %286
    %v288 = vrot.slane %v287, 6
    %v289 = vsel %vm281, %v288, %v287
    %v291 = vadd.f32 %v268, %v289
    %s292 = sld [smem:[#allocation4 + $0x23]]
    %s293 = sld [smem:[#allocation4 + $0x54]]
    %v294 = vstv %s292
    %v295 = vmul.f32 %v294, %v271
    %v296 = vstv %s293
    %v297 = vmul.f32 %v296, %v274
    %299 = vrot.lane.b32.xlu0 %v295, 48
    %v300 = vpop.permute.xlu0 %299
    %v301 = vrot.slane %v300, 6
    %vm302 = vcmask 392192
    %v303 = vsel %vm302, %v301, %v300
    %v305 = vadd.f32 %v284, %v303
    %307 = vrot.lane.b32.xlu0 %v297, 48
    %v308 = vpop.permute.xlu0 %307
    %v309 = vrot.slane %v308, 6
    %v310 = vsel %vm302, %v309, %v308
    %v312 = vadd.f32 %v291, %v310
    %s313 = sld [smem:[#allocation4 + $0x2a]]
    %s314 = sld [smem:[#allocation4 + $0x5b]]
    %v315 = vstv %s313
    %v316 = vmul.f32 %v315, %v271
    %v317 = vstv %s314
    %v318 = vmul.f32 %v317, %v274
    %320 = vrot.lane.b32.xlu0 %v316, 32
    %v321 = vpop.permute.xlu0 %320
    %v322 = vrot.slane %v321, 6
    %vm323 = vcmask 261120
    %v324 = vsel %vm323, %v322, %v321
    %v326 = vadd.f32 %v305, %v324
    %328 = vrot.lane.b32.xlu0 %v318, 32
    %v329 = vpop.permute.xlu0 %328
    %v330 = vrot.slane %v329, 6
    %v331 = vsel %vm323, %v330, %v329
    %v333 = vadd.f32 %v312, %v331
    %v334 = vadd.f32 %v326, %v333
    %v335 = vld [vmem:[#allocation8] ss:$8 sm:$0x3]
    %v337 = vlaneseq
    %v338 = vshrl.u32 %v337, 7
    %v339 = vsub.s32 0, %v338
    %v340 = vrot.slane %v335, %v339
    %v341 = vlaneseq
    %v342 = vshrl.u32 %v341, 7
    %v343 = vsub.s32 1, %v342
    %v344 = vrot.slane %v335, %v343
    %v348 = vcombine.high %v334, %v334
    %v350 = vunpack.c.l.s4 1983009808
    %v351 = vunpack.c.0.s8 %v350
    %v352 = vlaneseq
    %v353 = vshrl.u32 %v352, 7
    %v354 = vsub.s32 %v351, %v353
    %v355 = vrot.slane %v334, %v354
    %v357 = vunpack.c.l.s4 1983009808
    %v358 = vunpack.c.0.s8 %v357
    %v359 = vlaneseq
    %v360 = vshrl.u32 %v359, 7
    %v361 = vsub.s32 %v358, %v360
    %v362 = vrot.slane %v348, %v361
    %v363 = vcombine.high %v355, %v355
    %364 = vrot.lane.b32.xlu0 %v355, 51
    %v365 = vpop.permute.xlu0 %364
    %366 = vrot.lane.b32.xlu0 %v363, 51
    %v367 = vpop.permute.xlu0 %366
    %368 = vrot.lane.b32.xlu0 %v362, 51
    %v369 = vpop.permute.xlu0 %368
    %vm370 = vcmask 416768
    %v371 = vsel %vm370, %v365, %v367
    %v372 = vsel %vm370, %v367, %v369
    %v375 = vmul.f32 %v340, %v371
    %v376 = vmul.f32 %v344, %v372
    %s377 = sld [smem:[#allocation4 + $0x1]]
    %s378 = sld [smem:[#allocation4 + $0x32]]
    %v379 = vld [vmem:[#allocation2] sm:$0x3f]
    %v380 = vstv %s377
    %v381 = vmul.f32 %v380, %v379
    %v382 = vld [vmem:[%s195] sm:$0x3f]
    %v383 = vstv %s378
    %v384 = vmul.f32 %v383, %v382
    %s385 = sld [smem:[#allocation4 + $0x8]]
    %s386 = sld [smem:[#allocation4 + $0x39]]
    %v387 = vstv %s385
    %v388 = vmul.f32 %v387, %v379
    %v389 = vstv %s386
    %v390 = vmul.f32 %v389, %v382
    %392 = vrot.lane.b32.xlu0 %v388, 112
    %v393 = vpop.permute.xlu0 %392
    %v394 = vrot.slane %v393, 2
    %v395 = vsel %vm216, %v393, %v394
    %v397 = vadd.f32 %v381, %v395
    %399 = vrot.lane.b32.xlu0 %v390, 112
    %v400 = vpop.permute.xlu0 %399
    %v401 = vrot.slane %v400, 2
    %v402 = vsel %vm216, %v400, %v401
    %v404 = vadd.f32 %v384, %v402
    %s405 = sld [smem:[#allocation4 + $0xf]]
    %s406 = sld [smem:[#allocation4 + $0x40]]
    %v407 = vstv %s405
    %v408 = vmul.f32 %v407, %v379
    %v409 = vstv %s406
    %v410 = vmul.f32 %v409, %v382
    %412 = vrot.lane.b32.xlu0 %v408, 96
    %v413 = vpop.permute.xlu0 %412
    %v414 = vrot.slane %v413, 2
    %v415 = vsel %vm237, %v413, %v414
    %v417 = vadd.f32 %v397, %v415
    %419 = vrot.lane.b32.xlu0 %v410, 96
    %v420 = vpop.permute.xlu0 %419
    %v421 = vrot.slane %v420, 2
    %v422 = vsel %vm237, %v420, %v421
    %v424 = vadd.f32 %v404, %v422
    %s425 = sld [smem:[#allocation4 + $0x16]]
    %s426 = sld [smem:[#allocation4 + $0x47]]
    %v427 = vstv %s425
    %v428 = vmul.f32 %v427, %v379
    %v429 = vstv %s426
    %v430 = vmul.f32 %v429, %v382
    %432 = vrot.lane.b32.xlu0 %v428, 80
    %v433 = vpop.permute.xlu0 %432
    %v434 = vrot.slane %v433, 2
    %v435 = vsel %vm258, %v433, %v434
    %v437 = vadd.f32 %v417, %v435
    %439 = vrot.lane.b32.xlu0 %v430, 80
    %v440 = vpop.permute.xlu0 %439
    %v441 = vrot.slane %v440, 2
    %v442 = vsel %vm258, %v440, %v441
    %v444 = vadd.f32 %v424, %v442
    %s445 = sld [smem:[#allocation4 + $0x1d]]
    %s446 = sld [smem:[#allocation4 + $0x4e]]
    %v447 = vld [vmem:[#allocation2 + $0x2] sm:$0x3f]
    %v448 = vstv %s445
    %v449 = vmul.f32 %v448, %v447
    %v450 = vld [vmem:[%s195 + $0x2] sm:$0x3f]
    %v451 = vstv %s446
    %v452 = vmul.f32 %v451, %v450
    %454 = vrot.lane.b32.xlu0 %v449, 64
    %v455 = vpop.permute.xlu0 %454
    %v456 = vrot.slane %v455, 6
    %v457 = vsel %vm281, %v456, %v455
    %v459 = vadd.f32 %v437, %v457
    %461 = vrot.lane.b32.xlu0 %v452, 64
    %v462 = vpop.permute.xlu0 %461
    %v463 = vrot.slane %v462, 6
    %v464 = vsel %vm281, %v463, %v462
    %v466 = vadd.f32 %v444, %v464
    %s467 = sld [smem:[#allocation4 + $0x24]]
    %s468 = sld [smem:[#allocation4 + $0x55]]
    %v469 = vstv %s467
    %v470 = vmul.f32 %v469, %v447
    %v471 = vstv %s468
    %v472 = vmul.f32 %v471, %v450
    %474 = vrot.lane.b32.xlu0 %v470, 48
    %v475 = vpop.permute.xlu0 %474
    %v476 = vrot.slane %v475, 6
    %v477 = vsel %vm302, %v476, %v475
    %v479 = vadd.f32 %v459, %v477
    %481 = vrot.lane.b32.xlu0 %v472, 48
    %v482 = vpop.permute.xlu0 %481
    %v483 = vrot.slane %v482, 6
    %v484 = vsel %vm302, %v483, %v482
    %v486 = vadd.f32 %v466, %v484
    %s487 = sld [smem:[#allocation4 + $0x2b]]
    %s488 = sld [smem:[#allocation4 + $0x5c]]
    %v489 = vstv %s487
    %v490 = vmul.f32 %v489, %v447
    %v491 = vstv %s488
    %v492 = vmul.f32 %v491, %v450
    %494 = vrot.lane.b32.xlu0 %v490, 32
    %v495 = vpop.permute.xlu0 %494
    %v496 = vrot.slane %v495, 6
    %v497 = vsel %vm323, %v496, %v495
    %v499 = vadd.f32 %v479, %v497
    %501 = vrot.lane.b32.xlu0 %v492, 32
    %v502 = vpop.permute.xlu0 %501
    %v503 = vrot.slane %v502, 6
    %v504 = vsel %vm323, %v503, %v502
    %v506 = vadd.f32 %v486, %v504
    %v507 = vadd.f32 %v499, %v506
    %s508 = scalar_lea.vmem [#allocation8], 1
    %v509 = vld [vmem:[%s508] ss:$8 sm:$0x3]
    %v511 = vlaneseq
    %v512 = vshrl.u32 %v511, 7
    %v513 = vsub.s32 0, %v512
    %v514 = vrot.slane %v509, %v513
    %v515 = vlaneseq
    %v516 = vshrl.u32 %v515, 7
    %v517 = vsub.s32 1, %v516
    %v518 = vrot.slane %v509, %v517
    %v522 = vcombine.high %v507, %v507
    %v524 = vunpack.c.l.s4 1983009808
    %v525 = vunpack.c.0.s8 %v524
    %v526 = vlaneseq
    %v527 = vshrl.u32 %v526, 7
    %v528 = vsub.s32 %v525, %v527
    %v529 = vrot.slane %v507, %v528
    %v531 = vunpack.c.l.s4 1983009808
    %v532 = vunpack.c.0.s8 %v531
    %v533 = vlaneseq
    %v534 = vshrl.u32 %v533, 7
    %v535 = vsub.s32 %v532, %v534
    %v536 = vrot.slane %v522, %v535
    %v537 = vcombine.high %v529, %v529
    %538 = vrot.lane.b32.xlu0 %v529, 50
    %v539 = vpop.permute.xlu0 %538
    %540 = vrot.lane.b32.xlu0 %v537, 50
    %v541 = vpop.permute.xlu0 %540
    %542 = vrot.lane.b32.xlu0 %v536, 50
    %v543 = vpop.permute.xlu0 %542
    %vm544 = vcmask 408576
    %v545 = vsel %vm544, %v539, %v541
    %v546 = vsel %vm544, %v541, %v543
    %v549 = vmul.f32 %v514, %v545
    %v550 = vmul.f32 %v518, %v546
    %s551 = sld [smem:[#allocation4 + $0x2]]
    %s552 = sld [smem:[#allocation4 + $0x33]]
    %v553 = vld [vmem:[#allocation2] sm:$0x3f]
    %v554 = vstv %s551
    %v555 = vmul.f32 %v554, %v553
    %v556 = vld [vmem:[%s195] sm:$0x3f]
    %v557 = vstv %s552
    %v558 = vmul.f32 %v557, %v556
    %s559 = sld [smem:[#allocation4 + $0x9]]
    %s560 = sld [smem:[#allocation4 + $0x3a]]
    %v561 = vstv %s559
    %v562 = vmul.f32 %v561, %v553
    %v563 = vstv %s560
    %v564 = vmul.f32 %v563, %v556
    %566 = vrot.lane.b32.xlu0 %v562, 112
    %v567 = vpop.permute.xlu0 %566
    %v568 = vrot.slane %v567, 2
    %v569 = vsel %vm216, %v567, %v568
    %v571 = vadd.f32 %v555, %v569
    %573 = vrot.lane.b32.xlu0 %v564, 112
    %v574 = vpop.permute.xlu0 %573
    %v575 = vrot.slane %v574, 2
    %v576 = vsel %vm216, %v574, %v575
    %v578 = vadd.f32 %v558, %v576
    %s579 = sld [smem:[#allocation4 + $0x10]]
    %s580 = sld [smem:[#allocation4 + $0x41]]
    %v581 = vstv %s579
    %v582 = vmul.f32 %v581, %v553
    %v583 = vstv %s580
    %v584 = vmul.f32 %v583, %v556
    %586 = vrot.lane.b32.xlu0 %v582, 96
    %v587 = vpop.permute.xlu0 %586
    %v588 = vrot.slane %v587, 2
    %v589 = vsel %vm237, %v587, %v588
    %v591 = vadd.f32 %v571, %v589
    %593 = vrot.lane.b32.xlu0 %v584, 96
    %v594 = vpop.permute.xlu0 %593
    %v595 = vrot.slane %v594, 2
    %v596 = vsel %vm237, %v594, %v595
    %v598 = vadd.f32 %v578, %v596
    %s599 = sld [smem:[#allocation4 + $0x17]]
    %s600 = sld [smem:[#allocation4 + $0x48]]
    %v601 = vstv %s599
    %v602 = vmul.f32 %v601, %v553
    %v603 = vstv %s600
    %v604 = vmul.f32 %v603, %v556
    %606 = vrot.lane.b32.xlu0 %v602, 80
    %v607 = vpop.permute.xlu0 %606
    %v608 = vrot.slane %v607, 2
    %v609 = vsel %vm258, %v607, %v608
    %v611 = vadd.f32 %v591, %v609
    %613 = vrot.lane.b32.xlu0 %v604, 80
    %v614 = vpop.permute.xlu0 %613
    %v615 = vrot.slane %v614, 2
    %v616 = vsel %vm258, %v614, %v615
    %v618 = vadd.f32 %v598, %v616
    %s619 = sld [smem:[#allocation4 + $0x1e]]
    %s620 = sld [smem:[#allocation4 + $0x4f]]
    %v621 = vld [vmem:[#allocation2 + $0x2] sm:$0x3f]
    %v622 = vstv %s619
    %v623 = vmul.f32 %v622, %v621
    %v624 = vld [vmem:[%s195 + $0x2] sm:$0x3f]
    %v625 = vstv %s620
    %v626 = vmul.f32 %v625, %v624
    %628 = vrot.lane.b32.xlu0 %v623, 64
    %v629 = vpop.permute.xlu0 %628
    %v630 = vrot.slane %v629, 6
    %v631 = vsel %vm281, %v630, %v629
    %v633 = vadd.f32 %v611, %v631
    %635 = vrot.lane.b32.xlu0 %v626, 64
    %v636 = vpop.permute.xlu0 %635
    %v637 = vrot.slane %v636, 6
    %v638 = vsel %vm281, %v637, %v636
    %v640 = vadd.f32 %v618, %v638
    %s641 = sld [smem:[#allocation4 + $0x25]]
    %s642 = sld [smem:[#allocation4 + $0x56]]
    %v643 = vstv %s641
    %v644 = vmul.f32 %v643, %v621
    %v645 = vstv %s642
    %v646 = vmul.f32 %v645, %v624
    %648 = vrot.lane.b32.xlu0 %v644, 48
    %v649 = vpop.permute.xlu0 %648
    %v650 = vrot.slane %v649, 6
    %v651 = vsel %vm302, %v650, %v649
    %v653 = vadd.f32 %v633, %v651
    %655 = vrot.lane.b32.xlu0 %v646, 48
    %v656 = vpop.permute.xlu0 %655
    %v657 = vrot.slane %v656, 6
    %v658 = vsel %vm302, %v657, %v656
    %v660 = vadd.f32 %v640, %v658
    %s661 = sld [smem:[#allocation4 + $0x2c]]
    %s662 = sld [smem:[#allocation4 + $0x5d]]
    %v663 = vstv %s661
    %v664 = vmul.f32 %v663, %v621
    %v665 = vstv %s662
    %v666 = vmul.f32 %v665, %v624
    %668 = vrot.lane.b32.xlu0 %v664, 32
    %v669 = vpop.permute.xlu0 %668
    %v670 = vrot.slane %v669, 6
    %v671 = vsel %vm323, %v670, %v669
    %v673 = vadd.f32 %v653, %v671
    %675 = vrot.lane.b32.xlu0 %v666, 32
    %v676 = vpop.permute.xlu0 %675
    %v677 = vrot.slane %v676, 6
    %v678 = vsel %vm323, %v677, %v676
    %v680 = vadd.f32 %v660, %v678
    %v681 = vadd.f32 %v673, %v680
    %s682 = scalar_lea.vmem [#allocation8], 2
    %v683 = vld [vmem:[%s682] ss:$8 sm:$0x3]
    %v685 = vlaneseq
    %v686 = vshrl.u32 %v685, 7
    %v687 = vsub.s32 0, %v686
    %v688 = vrot.slane %v683, %v687
    %v689 = vlaneseq
    %v690 = vshrl.u32 %v689, 7
    %v691 = vsub.s32 1, %v690
    %v692 = vrot.slane %v683, %v691
    %v696 = vcombine.high %v681, %v681
    %v698 = vunpack.c.l.s4 1983009808
    %v699 = vunpack.c.0.s8 %v698
    %v700 = vlaneseq
    %v701 = vshrl.u32 %v700, 7
    %v702 = vsub.s32 %v699, %v701
    %v703 = vrot.slane %v681, %v702
    %v705 = vunpack.c.l.s4 1983009808
    %v706 = vunpack.c.0.s8 %v705
    %v707 = vlaneseq
    %v708 = vshrl.u32 %v707, 7
    %v709 = vsub.s32 %v706, %v708
    %v710 = vrot.slane %v696, %v709
    %v711 = vcombine.high %v703, %v703
    %712 = vrot.lane.b32.xlu0 %v703, 49
    %v713 = vpop.permute.xlu0 %712
    %714 = vrot.lane.b32.xlu0 %v711, 49
    %v715 = vpop.permute.xlu0 %714
    %716 = vrot.lane.b32.xlu0 %v710, 49
    %v717 = vpop.permute.xlu0 %716
    %vm718 = vcmask 400384
    %v719 = vsel %vm718, %v713, %v715
    %v720 = vsel %vm718, %v715, %v717
    %v723 = vmul.f32 %v688, %v719
    %v724 = vmul.f32 %v692, %v720
    %s725 = sld [smem:[#allocation4 + $0x3]]
    %s726 = sld [smem:[#allocation4 + $0x34]]
    %v727 = vld [vmem:[#allocation2] sm:$0x3f]
    %v728 = vstv %s725
    %v729 = vmul.f32 %v728, %v727
    %v730 = vld [vmem:[%s195] sm:$0x3f]
    %v731 = vstv %s726
    %v732 = vmul.f32 %v731, %v730
    %s733 = sld [smem:[#allocation4 + $0xa]]
    %s734 = sld [smem:[#allocation4 + $0x3b]]
    %v735 = vstv %s733
    %v736 = vmul.f32 %v735, %v727
    %v737 = vstv %s734
    %v738 = vmul.f32 %v737, %v730
    %740 = vrot.lane.b32.xlu0 %v736, 112
    %v741 = vpop.permute.xlu0 %740
    %v742 = vrot.slane %v741, 2
    %v743 = vsel %vm216, %v741, %v742
    %v745 = vadd.f32 %v729, %v743
    %747 = vrot.lane.b32.xlu0 %v738, 112
    %v748 = vpop.permute.xlu0 %747
    %v749 = vrot.slane %v748, 2
    %v750 = vsel %vm216, %v748, %v749
    %v752 = vadd.f32 %v732, %v750
    %s753 = sld [smem:[#allocation4 + $0x11]]
    %s754 = sld [smem:[#allocation4 + $0x42]]
    %v755 = vstv %s753
    %v756 = vmul.f32 %v755, %v727
    %v757 = vstv %s754
    %v758 = vmul.f32 %v757, %v730
    %760 = vrot.lane.b32.xlu0 %v756, 96
    %v761 = vpop.permute.xlu0 %760
    %v762 = vrot.slane %v761, 2
    %v763 = vsel %vm237, %v761, %v762
    %v765 = vadd.f32 %v745, %v763
    %767 = vrot.lane.b32.xlu0 %v758, 96
    %v768 = vpop.permute.xlu0 %767
    %v769 = vrot.slane %v768, 2
    %v770 = vsel %vm237, %v768, %v769
    %v772 = vadd.f32 %v752, %v770
    %s773 = sld [smem:[#allocation4 + $0x18]]
    %s774 = sld [smem:[#allocation4 + $0x49]]
    %v775 = vld [vmem:[#allocation2 + $0x2] sm:$0xf]
    %v776 = vstv %s773
    %v777 = vmul.f32 %v776, %v775
    %v778 = vld [vmem:[%s195 + $0x2] sm:$0xf]
    %v779 = vstv %s774
    %v780 = vmul.f32 %v779, %v778
    %782 = vrot.lane.b32.xlu0 %v777, 80
    %v783 = vpop.permute.xlu0 %782
    %v784 = vrot.slane %v783, 6
    %v785 = vsel %vm258, %v784, %v783
    %v787 = vadd.f32 %v765, %v785
    %789 = vrot.lane.b32.xlu0 %v780, 80
    %v790 = vpop.permute.xlu0 %789
    %v791 = vrot.slane %v790, 6
    %v792 = vsel %vm258, %v791, %v790
    %v794 = vadd.f32 %v772, %v792
    %s795 = sld [smem:[#allocation4 + $0x1f]]
    %s796 = sld [smem:[#allocation4 + $0x50]]
    %v797 = vld [vmem:[#allocation2 + $0x2] sm:$0x3f]
    %v798 = vstv %s795
    %v799 = vmul.f32 %v798, %v797
    %v800 = vld [vmem:[%s195 + $0x2] sm:$0x3f]
    %v801 = vstv %s796
    %v802 = vmul.f32 %v801, %v800
    %804 = vrot.lane.b32.xlu0 %v799, 64
    %v805 = vpop.permute.xlu0 %804
    %v806 = vrot.slane %v805, 6
    %v807 = vsel %vm281, %v806, %v805
    %v809 = vadd.f32 %v787, %v807
    %811 = vrot.lane.b32.xlu0 %v802, 64
    %v812 = vpop.permute.xlu0 %811
    %v813 = vrot.slane %v812, 6
    %v814 = vsel %vm281, %v813, %v812
    %v816 = vadd.f32 %v794, %v814
    %s817 = sld [smem:[#allocation4 + $0x26]]
    %s818 = sld [smem:[#allocation4 + $0x57]]
    %v819 = vstv %s817
    %v820 = vmul.f32 %v819, %v797
    %v821 = vstv %s818
    %v822 = vmul.f32 %v821, %v800
    %824 = vrot.lane.b32.xlu0 %v820, 48
    %v825 = vpop.permute.xlu0 %824
    %v826 = vrot.slane %v825, 6
    %v827 = vsel %vm302, %v826, %v825
    %v829 = vadd.f32 %v809, %v827
    %831 = vrot.lane.b32.xlu0 %v822, 48
    %v832 = vpop.permute.xlu0 %831
    %v833 = vrot.slane %v832, 6
    %v834 = vsel %vm302, %v833, %v832
    %v836 = vadd.f32 %v816, %v834
    %s837 = sld [smem:[#allocation4 + $0x2d]]
    %s838 = sld [smem:[#allocation4 + $0x5e]]
    %v839 = vstv %s837
    %v840 = vmul.f32 %v839, %v797
    %v841 = vstv %s838
    %v842 = vmul.f32 %v841, %v800
    %844 = vrot.lane.b32.xlu0 %v840, 32
    %v845 = vpop.permute.xlu0 %844
    %v846 = vrot.slane %v845, 6
    %v847 = vsel %vm323, %v846, %v845
    %v849 = vadd.f32 %v829, %v847
    %851 = vrot.lane.b32.xlu0 %v842, 32
    %v852 = vpop.permute.xlu0 %851
    %v853 = vrot.slane %v852, 6
    %v854 = vsel %vm323, %v853, %v852
    %v856 = vadd.f32 %v836, %v854
    %v857 = vadd.f32 %v849, %v856
    %s858 = sld [smem:[#allocation4 + $0x4]]
    %s859 = sld [smem:[#allocation4 + $0x35]]
    %v860 = vstv %s858
    %v861 = vmul.f32 %v860, %v727
    %v862 = vstv %s859
    %v863 = vmul.f32 %v862, %v730
    %s864 = sld [smem:[#allocation4 + $0xb]]
    %s865 = sld [smem:[#allocation4 + $0x3c]]
    %v866 = vstv %s864
    %v867 = vmul.f32 %v866, %v727
    %v868 = vstv %s865
    %v869 = vmul.f32 %v868, %v730
    %871 = vrot.lane.b32.xlu0 %v867, 112
    %v872 = vpop.permute.xlu0 %871
    %v873 = vrot.slane %v872, 2
    %v874 = vsel %vm216, %v872, %v873
    %v876 = vadd.f32 %v861, %v874
    %878 = vrot.lane.b32.xlu0 %v869, 112
    %v879 = vpop.permute.xlu0 %878
    %v880 = vrot.slane %v879, 2
    %v881 = vsel %vm216, %v879, %v880
    %v883 = vadd.f32 %v863, %v881
    %s884 = sld [smem:[#allocation4 + $0x12]]
    %s885 = sld [smem:[#allocation4 + $0x43]]
    %v886 = vstv %s884
    %v887 = vmul.f32 %v886, %v727
    %v888 = vstv %s885
    %v889 = vmul.f32 %v888, %v730
    %891 = vrot.lane.b32.xlu0 %v887, 96
    %v892 = vpop.permute.xlu0 %891
    %v893 = vrot.slane %v892, 2
    %v894 = vsel %vm237, %v892, %v893
    %v896 = vadd.f32 %v876, %v894
    %898 = vrot.lane.b32.xlu0 %v889, 96
    %v899 = vpop.permute.xlu0 %898
    %v900 = vrot.slane %v899, 2
    %v901 = vsel %vm237, %v899, %v900
    %v903 = vadd.f32 %v883, %v901
    %s904 = sld [smem:[#allocation4 + $0x19]]
    %s905 = sld [smem:[#allocation4 + $0x4a]]
    %v906 = vstv %s904
    %v907 = vmul.f32 %v906, %v797
    %v908 = vstv %s905
    %v909 = vmul.f32 %v908, %v800
    %911 = vrot.lane.b32.xlu0 %v907, 80
    %v912 = vpop.permute.xlu0 %911
    %v913 = vrot.slane %v912, 6
    %v914 = vsel %vm258, %v913, %v912
    %v916 = vadd.f32 %v896, %v914
    %918 = vrot.lane.b32.xlu0 %v909, 80
    %v919 = vpop.permute.xlu0 %918
    %v920 = vrot.slane %v919, 6
    %v921 = vsel %vm258, %v920, %v919
    %v923 = vadd.f32 %v903, %v921
    %s924 = sld [smem:[#allocation4 + $0x20]]
    %s925 = sld [smem:[#allocation4 + $0x51]]
    %v926 = vstv %s924
    %v927 = vmul.f32 %v926, %v797
    %v928 = vstv %s925
    %v929 = vmul.f32 %v928, %v800
    %931 = vrot.lane.b32.xlu0 %v927, 64
    %v932 = vpop.permute.xlu0 %931
    %v933 = vrot.slane %v932, 6
    %v934 = vsel %vm281, %v933, %v932
    %v936 = vadd.f32 %v916, %v934
    %938 = vrot.lane.b32.xlu0 %v929, 64
    %v939 = vpop.permute.xlu0 %938
    %v940 = vrot.slane %v939, 6
    %v941 = vsel %vm281, %v940, %v939
    %v943 = vadd.f32 %v923, %v941
    %s944 = sld [smem:[#allocation4 + $0x27]]
    %s945 = sld [smem:[#allocation4 + $0x58]]
    %v946 = vstv %s944
    %v947 = vmul.f32 %v946, %v797
    %v948 = vstv %s945
    %v949 = vmul.f32 %v948, %v800
    %951 = vrot.lane.b32.xlu0 %v947, 48
    %v952 = vpop.permute.xlu0 %951
    %v953 = vrot.slane %v952, 6
    %v954 = vsel %vm302, %v953, %v952
    %v956 = vadd.f32 %v936, %v954
    %958 = vrot.lane.b32.xlu0 %v949, 48
    %v959 = vpop.permute.xlu0 %958
    %v960 = vrot.slane %v959, 6
    %v961 = vsel %vm302, %v960, %v959
    %v963 = vadd.f32 %v943, %v961
    %s964 = sld [smem:[#allocation4 + $0x2e]]
    %s965 = sld [smem:[#allocation4 + $0x5f]]
    %v966 = vstv %s964
    %v967 = vmul.f32 %v966, %v797
    %v968 = vstv %s965
    %v969 = vmul.f32 %v968, %v800
    %971 = vrot.lane.b32.xlu0 %v967, 32
    %v972 = vpop.permute.xlu0 %971
    %v973 = vrot.slane %v972, 6
    %v974 = vsel %vm323, %v973, %v972
    %v976 = vadd.f32 %v956, %v974
    %978 = vrot.lane.b32.xlu0 %v969, 32
    %v979 = vpop.permute.xlu0 %978
    %v980 = vrot.slane %v979, 6
    %v981 = vsel %vm323, %v980, %v979
    %v983 = vadd.f32 %v963, %v981
    %v984 = vadd.f32 %v976, %v983
    %s985 = scalar_lea.vmem [#allocation8], 4
    %v986 = vld [vmem:[%s985] ss:$8 sm:$0x3]
    %v988 = vlaneseq
    %v989 = vshrl.u32 %v988, 7
    %v990 = vsub.s32 0, %v989
    %v991 = vrot.slane %v986, %v990
    %v992 = vlaneseq
    %v993 = vshrl.u32 %v992, 7
    %v994 = vsub.s32 1, %v993
    %v995 = vrot.slane %v986, %v994
    %v999 = vcombine.high %v984, %v984
    %v1001 = vunpack.c.l.s4 1983009808
    %v1002 = vunpack.c.0.s8 %v1001
    %v1003 = vlaneseq
    %v1004 = vshrl.u32 %v1003, 7
    %v1005 = vsub.s32 %v1002, %v1004
    %v1006 = vrot.slane %v984, %v1005
    %v1008 = vunpack.c.l.s4 1983009808
    %v1009 = vunpack.c.0.s8 %v1008
    %v1010 = vlaneseq
    %v1011 = vshrl.u32 %v1010, 7
    %v1012 = vsub.s32 %v1009, %v1011
    %v1013 = vrot.slane %v999, %v1012
    %v1014 = vcombine.high %v1006, %v1006
    %1015 = vrot.lane.b32.xlu0 %v1006, 47
    %v1016 = vpop.permute.xlu0 %1015
    %1017 = vrot.lane.b32.xlu0 %v1014, 47
    %v1018 = vpop.permute.xlu0 %1017
    %1019 = vrot.lane.b32.xlu0 %v1013, 47
    %v1020 = vpop.permute.xlu0 %1019
    %vm1021 = vcmask 384000
    %v1022 = vsel %vm1021, %v1016, %v1018
    %v1023 = vsel %vm1021, %v1018, %v1020
    %v1026 = vmul.f32 %v991, %v1022
    %v1027 = vmul.f32 %v995, %v1023
    %s1028 = sld [smem:[#allocation4 + $0x5]]
    %s1029 = sld [smem:[#allocation4 + $0x36]]
    %v1030 = vld [vmem:[#allocation2] sm:$0x3f]
    %v1031 = vstv %s1028
    %v1032 = vmul.f32 %v1031, %v1030
    %v1033 = vld [vmem:[%s195] sm:$0x3f]
    %v1034 = vstv %s1029
    %v1035 = vmul.f32 %v1034, %v1033
    %s1036 = sld [smem:[#allocation4 + $0xc]]
    %s1037 = sld [smem:[#allocation4 + $0x3d]]
    %v1038 = vstv %s1036
    %v1039 = vmul.f32 %v1038, %v1030
    %v1040 = vstv %s1037
    %v1041 = vmul.f32 %v1040, %v1033
    %1043 = vrot.lane.b32.xlu0 %v1039, 112
    %v1044 = vpop.permute.xlu0 %1043
    %v1045 = vrot.slane %v1044, 2
    %v1046 = vsel %vm216, %v1044, %v1045
    %v1048 = vadd.f32 %v1032, %v1046
    %1050 = vrot.lane.b32.xlu0 %v1041, 112
    %v1051 = vpop.permute.xlu0 %1050
    %v1052 = vrot.slane %v1051, 2
    %v1053 = vsel %vm216, %v1051, %v1052
    %v1055 = vadd.f32 %v1035, %v1053
    %s1056 = sld [smem:[#allocation4 + $0x13]]
    %s1057 = sld [smem:[#allocation4 + $0x44]]
    %v1058 = vstv %s1056
    %v1059 = vmul.f32 %v1058, %v1030
    %v1060 = vstv %s1057
    %v1061 = vmul.f32 %v1060, %v1033
    %1063 = vrot.lane.b32.xlu0 %v1059, 96
    %v1064 = vpop.permute.xlu0 %1063
    %v1065 = vrot.slane %v1064, 2
    %v1066 = vsel %vm237, %v1064, %v1065
    %v1068 = vadd.f32 %v1048, %v1066
    %1070 = vrot.lane.b32.xlu0 %v1061, 96
    %v1071 = vpop.permute.xlu0 %1070
    %v1072 = vrot.slane %v1071, 2
    %v1073 = vsel %vm237, %v1071, %v1072
    %v1075 = vadd.f32 %v1055, %v1073
    %s1076 = sld [smem:[#allocation4 + $0x1a]]
    %s1077 = sld [smem:[#allocation4 + $0x4b]]
    %v1078 = vld [vmem:[#allocation2 + $0x2] sm:$0x3f]
    %v1079 = vstv %s1076
    %v1080 = vmul.f32 %v1079, %v1078
    %v1081 = vld [vmem:[%s195 + $0x2] sm:$0x3f]
    %v1082 = vstv %s1077
    %v1083 = vmul.f32 %v1082, %v1081
    %1085 = vrot.lane.b32.xlu0 %v1080, 80
    %v1086 = vpop.permute.xlu0 %1085
    %v1087 = vrot.slane %v1086, 6
    %v1088 = vsel %vm258, %v1087, %v1086
    %v1090 = vadd.f32 %v1068, %v1088
    %1092 = vrot.lane.b32.xlu0 %v1083, 80
    %v1093 = vpop.permute.xlu0 %1092
    %v1094 = vrot.slane %v1093, 6
    %v1095 = vsel %vm258, %v1094, %v1093
    %v1097 = vadd.f32 %v1075, %v1095
    %s1098 = sld [smem:[#allocation4 + $0x21]]
    %s1099 = sld [smem:[#allocation4 + $0x52]]
    %v1100 = vstv %s1098
    %v1101 = vmul.f32 %v1100, %v1078
    %v1102 = vstv %s1099
    %v1103 = vmul.f32 %v1102, %v1081
    %1105 = vrot.lane.b32.xlu0 %v1101, 64
    %v1106 = vpop.permute.xlu0 %1105
    %v1107 = vrot.slane %v1106, 6
    %v1108 = vsel %vm281, %v1107, %v1106
    %v1110 = vadd.f32 %v1090, %v1108
    %1112 = vrot.lane.b32.xlu0 %v1103, 64
    %v1113 = vpop.permute.xlu0 %1112
    %v1114 = vrot.slane %v1113, 6
    %v1115 = vsel %vm281, %v1114, %v1113
    %v1117 = vadd.f32 %v1097, %v1115
    %s1118 = sld [smem:[#allocation4 + $0x28]]
    %s1119 = sld [smem:[#allocation4 + $0x59]]
    %v1120 = vstv %s1118
    %v1121 = vmul.f32 %v1120, %v1078
    %v1122 = vstv %s1119
    %v1123 = vmul.f32 %v1122, %v1081
    %1125 = vrot.lane.b32.xlu0 %v1121, 48
    %v1126 = vpop.permute.xlu0 %1125
    %v1127 = vrot.slane %v1126, 6
    %v1128 = vsel %vm302, %v1127, %v1126
    %v1130 = vadd.f32 %v1110, %v1128
    %1132 = vrot.lane.b32.xlu0 %v1123, 48
    %v1133 = vpop.permute.xlu0 %1132
    %v1134 = vrot.slane %v1133, 6
    %v1135 = vsel %vm302, %v1134, %v1133
    %v1137 = vadd.f32 %v1117, %v1135
    %s1138 = sld [smem:[#allocation4 + $0x2f]]
    %s1139 = sld [smem:[#allocation4 + $0x60]]
    %v1140 = vstv %s1138
    %v1141 = vmul.f32 %v1140, %v1078
    %v1142 = vstv %s1139
    %v1143 = vmul.f32 %v1142, %v1081
    %1145 = vrot.lane.b32.xlu0 %v1141, 32
    %v1146 = vpop.permute.xlu0 %1145
    %v1147 = vrot.slane %v1146, 6
    %v1148 = vsel %vm323, %v1147, %v1146
    %v1150 = vadd.f32 %v1130, %v1148
    %1152 = vrot.lane.b32.xlu0 %v1143, 32
    %v1153 = vpop.permute.xlu0 %1152
    %v1154 = vrot.slane %v1153, 6
    %v1155 = vsel %vm323, %v1154, %v1153
    %v1157 = vadd.f32 %v1137, %v1155
    %v1158 = vadd.f32 %v1150, %v1157
    %s1159 = scalar_lea.vmem [#allocation8], 5
    %v1160 = vld [vmem:[%s1159] ss:$8 sm:$0x3]
    %v1162 = vlaneseq
    %v1163 = vshrl.u32 %v1162, 7
    %v1164 = vsub.s32 0, %v1163
    %v1165 = vrot.slane %v1160, %v1164
    %v1166 = vlaneseq
    %v1167 = vshrl.u32 %v1166, 7
    %v1168 = vsub.s32 1, %v1167
    %v1169 = vrot.slane %v1160, %v1168
    %v1173 = vcombine.high %v1158, %v1158
    %v1175 = vunpack.c.l.s4 1983009808
    %v1176 = vunpack.c.0.s8 %v1175
    %v1177 = vlaneseq
    %v1178 = vshrl.u32 %v1177, 7
    %v1179 = vsub.s32 %v1176, %v1178
    %v1180 = vrot.slane %v1158, %v1179
    %v1182 = vunpack.c.l.s4 1983009808
    %v1183 = vunpack.c.0.s8 %v1182
    %v1184 = vlaneseq
    %v1185 = vshrl.u32 %v1184, 7
    %v1186 = vsub.s32 %v1183, %v1185
    %v1187 = vrot.slane %v1173, %v1186
    %v1188 = vcombine.high %v1180, %v1180
    %1189 = vrot.lane.b32.xlu0 %v1180, 46
    %v1190 = vpop.permute.xlu0 %1189
    %1191 = vrot.lane.b32.xlu0 %v1188, 46
    %v1192 = vpop.permute.xlu0 %1191
    %1193 = vrot.lane.b32.xlu0 %v1187, 46
    %v1194 = vpop.permute.xlu0 %1193
    %vm1195 = vcmask 375808
    %v1196 = vsel %vm1195, %v1190, %v1192
    %v1197 = vsel %vm1195, %v1192, %v1194
    %v1200 = vmul.f32 %v1165, %v1196
    %v1201 = vmul.f32 %v1169, %v1197
    %s1202 = sld [smem:[#allocation4 + $0x6]]
    %s1203 = sld [smem:[#allocation4 + $0x37]]
    %v1204 = vld [vmem:[#allocation2] sm:$0x3f]
    %v1205 = vstv %s1202
    %v1206 = vmul.f32 %v1205, %v1204
    %v1207 = vld [vmem:[%s195] sm:$0x3f]
    %v1208 = vstv %s1203
    %v1209 = vmul.f32 %v1208, %v1207
    %s1210 = sld [smem:[#allocation4 + $0xd]]
    %s1211 = sld [smem:[#allocation4 + $0x3e]]
    %v1212 = vstv %s1210
    %v1213 = vmul.f32 %v1212, %v1204
    %v1214 = vstv %s1211
    %v1215 = vmul.f32 %v1214, %v1207
    %1217 = vrot.lane.b32.xlu0 %v1213, 112
    %v1218 = vpop.permute.xlu0 %1217
    %v1219 = vrot.slane %v1218, 2
    %v1220 = vsel %vm216, %v1218, %v1219
    %v1222 = vadd.f32 %v1206, %v1220
    %1224 = vrot.lane.b32.xlu0 %v1215, 112
    %v1225 = vpop.permute.xlu0 %1224
    %v1226 = vrot.slane %v1225, 2
    %v1227 = vsel %vm216, %v1225, %v1226
    %v1229 = vadd.f32 %v1209, %v1227
    %s1230 = sld [smem:[#allocation4 + $0x14]]
    %s1231 = sld [smem:[#allocation4 + $0x45]]
    %v1232 = vstv %s1230
    %v1233 = vmul.f32 %v1232, %v1204
    %v1234 = vstv %s1231
    %v1235 = vmul.f32 %v1234, %v1207
    %1237 = vrot.lane.b32.xlu0 %v1233, 96
    %v1238 = vpop.permute.xlu0 %1237
    %v1239 = vrot.slane %v1238, 2
    %v1240 = vsel %vm237, %v1238, %v1239
    %v1242 = vadd.f32 %v1222, %v1240
    %1244 = vrot.lane.b32.xlu0 %v1235, 96
    %v1245 = vpop.permute.xlu0 %1244
    %v1246 = vrot.slane %v1245, 2
    %v1247 = vsel %vm237, %v1245, %v1246
    %v1249 = vadd.f32 %v1229, %v1247
    %s1250 = sld [smem:[#allocation4 + $0x1b]]
    %s1251 = sld [smem:[#allocation4 + $0x4c]]
    %v1252 = vld [vmem:[#allocation2 + $0x2] sm:$0x3f]
    %v1253 = vstv %s1250
    %v1254 = vmul.f32 %v1253, %v1252
    %v1255 = vld [vmem:[%s195 + $0x2] sm:$0x3f]
    %v1256 = vstv %s1251
    %v1257 = vmul.f32 %v1256, %v1255
    %1259 = vrot.lane.b32.xlu0 %v1254, 80
    %v1260 = vpop.permute.xlu0 %1259
    %v1261 = vrot.slane %v1260, 6
    %v1262 = vsel %vm258, %v1261, %v1260
    %v1264 = vadd.f32 %v1242, %v1262
    %1266 = vrot.lane.b32.xlu0 %v1257, 80
    %v1267 = vpop.permute.xlu0 %1266
    %v1268 = vrot.slane %v1267, 6
    %v1269 = vsel %vm258, %v1268, %v1267
    %v1271 = vadd.f32 %v1249, %v1269
    %s1272 = sld [smem:[#allocation4 + $0x22]]
    %s1273 = sld [smem:[#allocation4 + $0x53]]
    %v1274 = vstv %s1272
    %v1275 = vmul.f32 %v1274, %v1252
    %v1276 = vstv %s1273
    %v1277 = vmul.f32 %v1276, %v1255
    %1279 = vrot.lane.b32.xlu0 %v1275, 64
    %v1280 = vpop.permute.xlu0 %1279
    %v1281 = vrot.slane %v1280, 6
    %v1282 = vsel %vm281, %v1281, %v1280
    %v1284 = vadd.f32 %v1264, %v1282
    %1286 = vrot.lane.b32.xlu0 %v1277, 64
    %v1287 = vpop.permute.xlu0 %1286
    %v1288 = vrot.slane %v1287, 6
    %v1289 = vsel %vm281, %v1288, %v1287
    %v1291 = vadd.f32 %v1271, %v1289
    %s1292 = sld [smem:[#allocation4 + $0x29]]
    %s1293 = sld [smem:[#allocation4 + $0x5a]]
    %v1294 = vstv %s1292
    %v1295 = vmul.f32 %v1294, %v1252
    %v1296 = vstv %s1293
    %v1297 = vmul.f32 %v1296, %v1255
    %1299 = vrot.lane.b32.xlu0 %v1295, 48
    %v1300 = vpop.permute.xlu0 %1299
    %v1301 = vrot.slane %v1300, 6
    %v1302 = vsel %vm302, %v1301, %v1300
    %v1304 = vadd.f32 %v1284, %v1302
    %1306 = vrot.lane.b32.xlu0 %v1297, 48
    %v1307 = vpop.permute.xlu0 %1306
    %v1308 = vrot.slane %v1307, 6
    %v1309 = vsel %vm302, %v1308, %v1307
    %v1311 = vadd.f32 %v1291, %v1309
    %s1312 = sld [smem:[#allocation4 + $0x30]]
    %s1313 = sld [smem:[#allocation4 + $0x61]]
    %v1314 = vstv %s1312
    %v1315 = vmul.f32 %v1314, %v1252
    %v1316 = vstv %s1313
    %v1317 = vmul.f32 %v1316, %v1255
    %1319 = vrot.lane.b32.xlu0 %v1315, 32
    %v1320 = vpop.permute.xlu0 %1319
    %v1321 = vrot.slane %v1320, 6
    %v1322 = vsel %vm323, %v1321, %v1320
    %v1324 = vadd.f32 %v1304, %v1322
    %1326 = vrot.lane.b32.xlu0 %v1317, 32
    %v1327 = vpop.permute.xlu0 %1326
    %v1328 = vrot.slane %v1327, 6
    %v1329 = vsel %vm323, %v1328, %v1327
    %v1331 = vadd.f32 %v1311, %v1329
    %v1332 = vadd.f32 %v1324, %v1331
    %s1333 = scalar_lea.vmem [#allocation8], 6
    %v1334 = vld [vmem:[%s1333] ss:$8 sm:$0x3]
    %v1336 = vlaneseq
    %v1337 = vshrl.u32 %v1336, 7
    %v1338 = vsub.s32 0, %v1337
    %v1339 = vrot.slane %v1334, %v1338
    %v1340 = vlaneseq
    %v1341 = vshrl.u32 %v1340, 7
    %v1342 = vsub.s32 1, %v1341
    %v1343 = vrot.slane %v1334, %v1342
    %v1347 = vcombine.high %v1332, %v1332
    %v1349 = vunpack.c.l.s4 1983009808
    %v1350 = vunpack.c.0.s8 %v1349
    %v1351 = vlaneseq
    %v1352 = vshrl.u32 %v1351, 7
    %v1353 = vsub.s32 %v1350, %v1352
    %v1354 = vrot.slane %v1332, %v1353
    %v1356 = vunpack.c.l.s4 1983009808
    %v1357 = vunpack.c.0.s8 %v1356
    %v1358 = vlaneseq
    %v1359 = vshrl.u32 %v1358, 7
    %v1360 = vsub.s32 %v1357, %v1359
    %v1361 = vrot.slane %v1347, %v1360
    %v1362 = vcombine.high %v1354, %v1354
    %1363 = vrot.lane.b32.xlu0 %v1354, 45
    %v1364 = vpop.permute.xlu0 %1363
    %1365 = vrot.lane.b32.xlu0 %v1362, 45
    %v1366 = vpop.permute.xlu0 %1365
    %1367 = vrot.lane.b32.xlu0 %v1361, 45
    %v1368 = vpop.permute.xlu0 %1367
    %vm1369 = vcmask 367616
    %v1370 = vsel %vm1369, %v1364, %v1366
    %v1371 = vsel %vm1369, %v1366, %v1368
    %v1374 = vmul.f32 %v1339, %v1370
    %v1375 = vmul.f32 %v1343, %v1371
    %v1376 = vadd.f32 %v375, %v549
    %v1377 = vadd.f32 %v376, %v550
    %v1379 = vcombine.high %v857, %v857
    %v1381 = vunpack.c.l.s4 1983009808
    %v1382 = vunpack.c.0.s8 %v1381
    %v1383 = vlaneseq
    %v1384 = vshrl.u32 %v1383, 7
    %v1385 = vsub.s32 %v1382, %v1384
    %v1386 = vrot.slane %v857, %v1385
    %v1388 = vunpack.c.l.s4 1983009808
    %v1389 = vunpack.c.0.s8 %v1388
    %v1390 = vlaneseq
    %v1391 = vshrl.u32 %v1390, 7
    %v1392 = vsub.s32 %v1389, %v1391
    %v1393 = vrot.slane %v1379, %v1392
    %v1394 = vcombine.high %v1386, %v1386
    %1395 = vrot.lane.b32.xlu0 %v1386, 48
    %v1396 = vpop.permute.xlu0 %1395
    %1397 = vrot.lane.b32.xlu0 %v1394, 48
    %v1398 = vpop.permute.xlu0 %1397
    %1399 = vrot.lane.b32.xlu0 %v1393, 48
    %v1400 = vpop.permute.xlu0 %1399
    %v1401 = vsel %vm302, %v1396, %v1398
    %v1402 = vsel %vm302, %v1398, %v1400
    %v1405 = vadd.f32 %v723, %v1401
    %v1406 = vadd.f32 %v724, %v1402
    %v1407 = vadd.f32 %v1026, %v1200
    %v1408 = vadd.f32 %v1027, %v1201
    %v1409 = vadd.f32 %v1376, %v1405
    %v1410 = vadd.f32 %v1377, %v1406
    %v1411 = vadd.f32 %v1407, %v1374
    %v1412 = vadd.f32 %v1408, %v1375
    %v1413 = vadd.f32 %v1409, %v1411
    %v1414 = vadd.f32 %v1410, %v1412
    %v1415 = vstv %s197
    %v1416 = vadd.f32 %v1413, %v1415
    %v1417 = vadd.f32 %v1414, %v1415
    %v1418 = vxor.u32 %v1416, 2147483648
    %v1419 = vxor.u32 %v1417, 2147483648
    %v1420 = vmul.f32 %v1418, 1.442695
    %v1421 = vpow.pop %v1420
    %v1422 = vmul.f32 %v1419, 1.442695
    %v1423 = vpow.pop %v1422
    %v1424 = vadd.f32 %v1421, 1.0
    %v1425 = vadd.f32 %v1423, 1.0
    %v1426 = vrcp.pop %v1424
    %v1427 = vmul.f32 1.0, %v1426
    %v1428 = vrcp.pop %v1425
    %v1429 = vmul.f32 1.0, %v1428
    %v1430 = vadd.f32 %v1427, 1.0
    %v1431 = vadd.f32 %v1429, 1.0
    %v1432 = vld [vmem:[#allocation9] sm:$0xff]
    %v1433 = vld [vmem:[#allocation9 + $0x8] sm:$0xff]
    %v1436 = vcombine.low %v1430, %v1431
    %v1438 = vunpack.c.l.s4 1966171168
    %v1439 = vunpack.c.0.s8 %v1438
    %v1440 = vlaneseq
    %v1441 = vshrl.u32 %v1440, 7
    %v1442 = vsub.s32 %v1439, %v1441
    %v1443 = vrot.slane %v1436, %v1442
    %v1444 = vcombine.high %v1443, %v1443
    %v1446 = vunpack.c.l.s4 1966171168
    %v1447 = vunpack.c.0.s8 %v1446
    %v1448 = vlaneseq
    %v1449 = vshrl.u32 %v1448, 7
    %v1450 = vsub.s32 %v1447, %v1449
    %v1451 = vrot.slane %v1443, %v1450
    %v1453 = vunpack.c.l.s4 1966171168
    %v1454 = vunpack.c.0.s8 %v1453
    %v1455 = vlaneseq
    %v1456 = vshrl.u32 %v1455, 7
    %v1457 = vsub.s32 %v1454, %v1456
    %v1458 = vrot.slane %v1444, %v1457
    %v1459 = vlaneseq
    %v1460 = vshrl.u32 %v1459, 7
    %v1461 = vsub.s32 0, %v1460
    %v1462 = vrot.slane %v1451, %v1461
    %v1463 = vlaneseq
    %v1464 = vshrl.u32 %v1463, 7
    %v1465 = vsub.s32 1, %v1464
    %v1466 = vrot.slane %v1451, %v1465
    %v1467 = vlaneseq
    %v1468 = vshrl.u32 %v1467, 7
    %v1469 = vsub.s32 0, %v1468
    %v1470 = vrot.slane %v1458, %v1469
    %v1471 = vlaneseq
    %v1472 = vshrl.u32 %v1471, 7
    %v1473 = vsub.s32 1, %v1472
    %v1474 = vrot.slane %v1458, %v1473
    %v1475 = vcombine.low %v1462, %v1466
    %v1476 = vcombine.low %v1470, %v1474
    %v1479 = vmul.f32 %v1432, %v1475
    %v1480 = vmul.f32 %v1433, %v1476
    %1481 = vst [vmem:[#allocation11] sm:$0xff] %v1479
    %1482 = vst [vmem:[#allocation11 + $0x8] sm:$0xff] %v1480
    // Predicated region
    $region30: #{tpu_custom_call.1} parent=1 // pred_check
      _
    $region31: #{tpu_custom_call.1} parent=1 // pred_check_branch
      %1484 = sbr.rel (0) target = $region33
    $region32: #{tpu_custom_call.1} parent=1 // pred_region
      %s1486 = ssub.s32 256, 256
      %1487 = vsyncadd [#allocation6], %s1486
      %s1488 = sshll.u32 [#allocation11], 4
      %s1489 = int_to_ptr.vmem [resolvable:$true] %s1488
      %1494 = dma.vmem_to_hbm [thread:$0]  %s1489, 256, %s4, [#allocation6], 128, 128, 8
    $region33: #{tpu_custom_call.1} parent=1 // pred_fallthru
      _
    // Predicated region
    $region34: #{tpu_custom_call.1} parent=1 // pred_check
      _
    $region35: #{tpu_custom_call.1} parent=1 // pred_check_branch
      %1496 = sbr.rel (0) target = $region37
    $region36: #{tpu_custom_call.1} parent=1 // pred_region
      %1497 = dma.done [#allocation6], 256
    $region37: #{tpu_custom_call.1} parent=1 // pred_fallthru
      _
    %1498 = vsyncpa [#allocation5], 1
    %1499 = vsyncpa [#allocation10], 1
    %1500 = vsyncpa [#allocation6], 1
    %1501 = vsyncpa [#allocation7], 1

</llo_original>
